<compile_context>
chip_gen: v7x
topology: tpu7x:2x2x1
jax: 0.10.0
libtpu: 0.0.40
codegen_flags: <defaults>
</compile_context>

<pallas_src>
import jax
import jax.numpy as jnp
import numpy as np
from jax import lax
from jax.experimental import pallas as pl
from jax.experimental.pallas import tpu as pltpu

# ---------------- problem sizes (small, consistent with the module) ----------
B = 2          # batch
N = 16         # node_num
DIM_IN = 4     # dim_in
HID = 32       # dim_out / hidden_dim
CHEB_K = 3     # cheb_k
EMB = 8        # embed_dim
CIN = DIM_IN + HID            # AGCN input channels (x ++ state)
KCIN = CHEB_K * CIN           # cheb-stacked channels
BN = B * N                    # flattened batch*node rows
T_STEPS = 8                   # sequence length driven through the fused kernel


# ---------------- fused sequence kernel ---------------------------------------
def agcrn_seq_kernel(emb_ref, x_ref, st0_ref, wx_ref, ws_ref, bias_ref,
                     h_ref, sup_ref, st_ref):
    t = pl.program_id(0)

    # ---- once per call: adaptive block-diagonal supports + state init -------
    @pl.when(t == 0)
    def _():
        e = emb_ref[...]                                        # [N, EMB]
        a = lax.dot_general(e, e, (((1,), (1,)), ((), ())),     # e @ e.T (no transpose)
                            preferred_element_type=jnp.float32)
        a = jnp.maximum(a, 0.0)                                 # relu
        a = a - jnp.max(a, axis=1, keepdims=True)               # stable softmax, dim=1
        p = jnp.exp(a)
        s = p / jnp.sum(p, axis=1, keepdims=True)

        # Chebyshev stack for k >= 1 (T_0 == I is handled implicitly later).
        ri = lax.broadcasted_iota(jnp.int32, (N, N), 0)
        ci = lax.broadcasted_iota(jnp.int32, (N, N), 1)
        eye = (ri == ci).astype(jnp.float32)
        sups = [s]
        t_km2, t_km1 = eye, s
        for _ in range(2, CHEB_K):                              # static unroll
            t_k = 2.0 * jnp.dot(s, t_km1,
                                preferred_element_type=jnp.float32) - t_km2
            sups.append(t_k)
            t_km2, t_km1 = t_km1, t_k

        # Block-diagonal kron(I_B, T_k) via 0/1 selection matrices E_b
        # (iota + compare + dot_general only -> robust lowering; once per call).
        bri = lax.broadcasted_iota(jnp.int32, (BN, N), 0)
        bci = lax.broadcasted_iota(jnp.int32, (BN, N), 1)
        for k in range(CHEB_K - 1):
            acc = jnp.zeros((BN, BN), jnp.float32)
            for bb in range(B):
                eb = (bri == bci + bb * N).astype(jnp.float32)  # [BN, N]
                et = jnp.dot(eb, sups[k],
                             preferred_element_type=jnp.float32)
                acc = acc + lax.dot_general(et, eb, (((1,), (1,)), ((), ())),
                                            preferred_element_type=jnp.float32)
            sup_ref[k] = acc

        st_ref[...] = st0_ref[...]                              # initial GRU state

    # ---- per-step GRU cell ---------------------------------------------------
    xt = x_ref[...]                                             # [BN, DIM_IN]
    st = st_ref[...]                                            # [BN, HID]
    bias = bias_ref[...]                                        # [2, 2*HID]
    bg = bias[0:1, :]                                           # [1, 2*HID]
    bu = bias[1:2, :HID]                                        # [1, HID]

    # Shared x-branch projection (gate + update fused): once per k, 96 lanes.
    yx = [jnp.dot(xt, wx_ref[k], preferred_element_type=jnp.float32)
          for k in range(CHEB_K)]

    def agcn(state_like, lo, hi, b):
        # y_k = x @ Wx_k + state_like @ Ws_k       (concat-free channel proj.)
        y = [yx[k][:, lo:hi]
             + jnp.dot(state_like, ws_ref[k][:, lo:hi],
                       preferred_element_type=jnp.float32)
             for k in range(CHEB_K)]
        acc = y[0]                                              # support_0 == I (free)
        for k in range(1, CHEB_K):                              # block-diag supports
            acc = acc + jnp.dot(sup_ref[k - 1], y[k],
                                preferred_element_type=jnp.float32)
        return acc + b

    # gate: z_r = sigmoid(AGCN([x, state]))
    zr = jax.nn.sigmoid(agcn(st, 0, 2 * HID, bg))               # [BN, 2*HID]
    z = zr[:, :HID]
    r = zr[:, HID:2 * HID]
    # candidate: hc = tanh(AGCN([x, z*state]))
    hc = jnp.tanh(agcn(z * st, 2 * HID, 3 * HID, bu))           # [BN, HID]
    # GRU-style mix
    h = r * st + (1.0 - r) * hc
    h_ref[...] = h                                              # per-step output
    st_ref[...] = h                                             # carried state
    # TODO(synk): pack 4 consecutive steps' h into a [BN, 4*HID] lane-dense
    # output block to replace the 32-lane masked stores with full-width stores.


# ---------------- host-side packing + wrappers --------------------------------
def _pack_params(wg, bg, wu, bu):
    # Split per Chebyshev order into x-rows / state-rows, pack gate||update cols.
    wg3 = wg.reshape(CHEB_K, CIN, 2 * HID)
    wu3 = wu.reshape(CHEB_K, CIN, HID)
    wx = jnp.concatenate([wg3[:, :DIM_IN, :], wu3[:, :DIM_IN, :]], axis=-1)  # [K,4,96]
    ws = jnp.concatenate([wg3[:, DIM_IN:, :], wu3[:, DIM_IN:, :]], axis=-1)  # [K,32,96]
    bias = (jnp.zeros((2, 2 * HID), jnp.float32)
            .at[0].set(bg).at[1, :HID].set(bu))                              # packed biases
    return wx, ws, bias


@jax.jit
def agcrn_cell_seq(x_seq, state0, node_embeddings, wg, bg, wu, bu):
    """Drive the AGCRN cell for T steps inside one pallas_call (grid=(T,))."""
    T = x_seq.shape[0]
    wx, ws, bias = _pack_params(wg, bg, wu, bu)
    h_seq = pl.pallas_call(
        agcrn_seq_kernel,
        out_shape=jax.ShapeDtypeStruct((T, BN, HID), jnp.float32),
        grid=(T,),
        in_specs=[
            pl.BlockSpec((N, EMB), lambda t: (0, 0)),               # node embeddings
            pl.BlockSpec((None, BN, DIM_IN), lambda t: (t, 0, 0)),  # x_t (streamed)
            pl.BlockSpec((BN, HID), lambda t: (0, 0)),              # initial state
            pl.BlockSpec((CHEB_K, DIM_IN, 3 * HID), lambda t: (0, 0, 0)),  # Wx packed
            pl.BlockSpec((CHEB_K, HID, 3 * HID), lambda t: (0, 0, 0)),     # Ws packed
            pl.BlockSpec((2, 2 * HID), lambda t: (0, 0)),           # biases packed
        ],
        out_specs=pl.BlockSpec((None, BN, HID), lambda t: (t, 0, 0)),
        scratch_shapes=[
            pltpu.VMEM((CHEB_K - 1, BN, BN), jnp.float32),   # block-diag supports
            pltpu.VMEM((BN, HID), jnp.float32),              # resident GRU state
        ],
        compiler_params=pltpu.CompilerParams(
            dimension_semantics=("arbitrary",)),             # sequential carry over T
    )(node_embeddings, x_seq.reshape(T, BN, DIM_IN),
      state0.reshape(BN, HID), wx, ws, bias)
    return h_seq.reshape(T, B, N, HID)


def agcrn_cell(x, state, node_embeddings, wg, bg, wu, bu):
    """Single AGCRNCell.forward step (exactly the PyTorch module semantics)."""
    return agcrn_cell_seq(x[None], state, node_embeddings, wg, bg, wu, bu)[0]


# ---------------- pure-JAX reference (mirrors the PyTorch module) -------------
def agcn_ref(x, node_embeddings, w, b):
    s = jax.nn.softmax(jax.nn.relu(node_embeddings @ node_embeddings.T), axis=1)
    sup_set = [jnp.eye(N, dtype=jnp.float32), s]
    for _ in range(2, CHEB_K):
        sup_set.append(2 * s @ sup_set[-1] - sup_set[-2])
    xg = jnp.concatenate([jnp.einsum('nm,bmc->bnc', sk, x) for sk in sup_set],
                         axis=-1)
    return jnp.einsum('bni,io->bno', xg, w) + b


def agcrn_cell_ref(x, state, node_embeddings, wg, bg, wu, bu):
    ins = jnp.concatenate([x, state], axis=-1)
    zr = jax.nn.sigmoid(agcn_ref(ins, node_embeddings, wg, bg))
    z, r = zr[..., :HID], zr[..., HID:]
    cand = jnp.concatenate([x, z * state], axis=-1)
    hc = jnp.tanh(agcn_ref(cand, node_embeddings, wu, bu))
    return r * state + (1.0 - r) * hc


def agcrn_seq_ref(x_seq, state0, node_embeddings, wg, bg, wu, bu):
    hs, st = [], state0
    for t in range(x_seq.shape[0]):
        st = agcrn_cell_ref(x_seq[t], st, node_embeddings, wg, bg, wu, bu)
        hs.append(st)
    return jnp.stack(hs, axis=0)


# ---------------- deterministic parameter init (xavier_normal / zeros) --------
def xavier_normal(key, fan_in, fan_out):
    std = np.sqrt(2.0 / (fan_in + fan_out))
    return jax.random.normal(key, (fan_in, fan_out), jnp.float32) * std


if __name__ == "__main__":
    key = jax.random.PRNGKey(0)
    k_x, k_s, k_e, k_wg, k_wu = jax.random.split(key, 5)

    x_seq = jax.random.normal(k_x, (T_STEPS, B, N, DIM_IN), jnp.float32)
    state0 = jax.random.normal(k_s, (B, N, HID), jnp.float32)
    node_embeddings = jax.random.normal(k_e, (N, EMB), jnp.float32)

    wg = xavier_normal(k_wg, KCIN, 2 * HID)   # gate AGCN weights
    bg = jnp.zeros((2 * HID,), jnp.float32)
    wu = xavier_normal(k_wu, KCIN, HID)       # update AGCN weights
    bu = jnp.zeros((HID,), jnp.float32)

    # Single-step check (== the module's forward).
    h1 = jax.block_until_ready(
        agcrn_cell(x_seq[0], state0, node_embeddings, wg, bg, wu, bu))
    h1_ref = agcrn_cell_ref(x_seq[0], state0, node_embeddings, wg, bg, wu, bu)
    np.testing.assert_allclose(np.asarray(h1), np.asarray(h1_ref),
                               rtol=1e-4, atol=1e-5)

    # Fused T-step sequence check (cell applied repeatedly, state in VMEM).
    h_seq = jax.block_until_ready(
        agcrn_cell_seq(x_seq, state0, node_embeddings, wg, bg, wu, bu))
    h_seq_ref = agcrn_seq_ref(x_seq, state0, node_embeddings, wg, bg, wu, bu)
    np.testing.assert_allclose(np.asarray(h_seq), np.asarray(h_seq_ref),
                               rtol=5e-4, atol=1e-4)
    print("KERNEL_OK")
</pallas_src>

<mosaic_0001>
module attributes {stable_mosaic.version = 11 : i64} {
  func.func @agcrn_seq_kernel(%arg0: i32, %arg1: memref<16x8xf32, #tpu.memory_space<vmem>>, %arg2: memref<1x32x4xf32, #tpu.memory_space<vmem>>, %arg3: memref<32x32xf32, #tpu.memory_space<vmem>>, %arg4: memref<3x4x96xf32, #tpu.memory_space<vmem>>, %arg5: memref<3x32x96xf32, #tpu.memory_space<vmem>>, %arg6: memref<2x64xf32, #tpu.memory_space<vmem>>, %arg7: memref<1x32x32xf32, #tpu.memory_space<vmem>>, %arg8: memref<2x32x32xf32, #tpu.memory_space<vmem>>, %arg9: memref<32x32xf32, #tpu.memory_space<vmem>>) attributes {dimension_semantics = [#tpu.dimension_semantics<arbitrary>], iteration_bounds = array<i64: 1>, scalar_prefetch = 0 : i64, scratch_operands = 2 : i64, tpu.core_type = #tpu.core_type<tc>, window_params = [{pipeline_mode = #tpu.pipeline_mode<synchronous>, transform_indices = @transform_0, window_bounds = array<i64: 16, 8>}, {transform_indices = @transform_1, window_bounds = array<i64: 1, 32, 4>}, {pipeline_mode = #tpu.pipeline_mode<synchronous>, transform_indices = @transform_2, window_bounds = array<i64: 32, 32>}, {pipeline_mode = #tpu.pipeline_mode<synchronous>, transform_indices = @transform_3, window_bounds = array<i64: 3, 4, 96>}, {pipeline_mode = #tpu.pipeline_mode<synchronous>, transform_indices = @transform_4, window_bounds = array<i64: 3, 32, 96>}, {pipeline_mode = #tpu.pipeline_mode<synchronous>, transform_indices = @transform_5, window_bounds = array<i64: 2, 64>}, {transform_indices = @transform_6, window_bounds = array<i64: 1, 32, 32>}]} {
    %c0_i32 = arith.constant 0 : i32
    %0 = arith.cmpi eq, %arg0, %c0_i32 : i32
    %1 = arith.extui %0 : i1 to i32
    %c0_i32_0 = arith.constant 0 : i32
    %2 = arith.cmpi ne, %1, %c0_i32_0 : i32
    scf.if %2 {
      %c0_63 = arith.constant 0 : index
      %c0_64 = arith.constant 0 : index
      %92 = vector.load %arg1[%c0_63, %c0_64] : memref<16x8xf32, #tpu.memory_space<vmem>>, vector<16x8xf32>
      %cst_65 = arith.constant dense<0.000000e+00> : vector<16x16xf32>
      %93 = tpu.matmul %92, %92, %cst_65 {dimension_numbers = #tpu.dot_dimension_numbers<[1], [1], [0], [0], [0, 0, 1, 0], [], []>} : vector<16x8xf32>, vector<16x8xf32>, vector<16x16xf32> -> vector<16x16xf32>
      %cst_66 = arith.constant 0.000000e+00 : f32
      %94 = vector.broadcast %cst_66 : f32 to vector<16x16xf32>
      %95 = arith.maximumf %93, %94 : vector<16x16xf32>
      %cst_67 = arith.constant dense<0xFF800000> : vector<16xf32>
      %96 = vector.multi_reduction <maximumf>, %95, %cst_67 [1] : vector<16x16xf32> to vector<16xf32>
      %97 = vector.shape_cast %96 : vector<16xf32> to vector<16x1xf32>
      %98 = vector.broadcast %97 : vector<16x1xf32> to vector<16x16xf32>
      %99 = arith.subf %95, %98 : vector<16x16xf32>
      %100 = math.exp %99 : vector<16x16xf32>
      %cst_68 = arith.constant dense<0.000000e+00> : vector<16xf32>
      %101 = vector.multi_reduction <add>, %100, %cst_68 [1] : vector<16x16xf32> to vector<16xf32>
      %102 = vector.shape_cast %101 : vector<16xf32> to vector<16x1xf32>
      %103 = vector.broadcast %102 : vector<16x1xf32> to vector<16x16xf32>
      %104 = arith.divf %100, %103 : vector<16x16xf32>
      %105 = tpu.iota {dimensions = array<i32: 0>} : vector<16x16xi32>
      %106 = tpu.iota {dimensions = array<i32: 1>} : vector<16x16xi32>
      %107 = arith.cmpi eq, %105, %106 : vector<16x16xi32>
      %108 = arith.extui %107 : vector<16x16xi1> to vector<16x16xi32>
      %109 = arith.sitofp %108 : vector<16x16xi32> to vector<16x16xf32>
      %cst_69 = arith.constant dense<0.000000e+00> : vector<16x16xf32>
      %110 = tpu.matmul %104, %104, %cst_69 {dimension_numbers = #tpu.dot_dimension_numbers<[1], [0], [0], [1], [0, 0, 1, 1], [], []>} : vector<16x16xf32>, vector<16x16xf32>, vector<16x16xf32> -> vector<16x16xf32>
      %cst_70 = arith.constant 2.000000e+00 : f32
      %111 = vector.broadcast %cst_70 : f32 to vector<16x16xf32>
      %112 = arith.mulf %111, %110 : vector<16x16xf32>
      %113 = arith.subf %112, %109 : vector<16x16xf32>
      %114 = tpu.iota {dimensions = array<i32: 0>} : vector<32x16xi32>
      %115 = tpu.iota {dimensions = array<i32: 1>} : vector<32x16xi32>
      %cst_71 = arith.constant 0.000000e+00 : f32
      %116 = vector.broadcast %cst_71 : f32 to vector<32x32xf32>
      %c0_i32_72 = arith.constant 0 : i32
      %117 = vector.broadcast %c0_i32_72 : i32 to vector<32x16xi32>
      %118 = arith.addi %115, %117 : vector<32x16xi32>
      %119 = arith.cmpi eq, %114, %118 : vector<32x16xi32>
      %120 = arith.extui %119 : vector<32x16xi1> to vector<32x16xi32>
      %121 = arith.sitofp %120 : vector<32x16xi32> to vector<32x16xf32>
      %cst_73 = arith.constant dense<0.000000e+00> : vector<32x16xf32>
      %122 = tpu.matmul %121, %104, %cst_73 {dimension_numbers = #tpu.dot_dimension_numbers<[1], [0], [0], [1], [0, 0, 1, 1], [], []>} : vector<32x16xf32>, vector<16x16xf32>, vector<32x16xf32> -> vector<32x16xf32>
      %cst_74 = arith.constant dense<0.000000e+00> : vector<32x32xf32>
      %123 = tpu.matmul %122, %121, %cst_74 {dimension_numbers = #tpu.dot_dimension_numbers<[1], [1], [0], [0], [0, 0, 1, 0], [], []>} : vector<32x16xf32>, vector<32x16xf32>, vector<32x32xf32> -> vector<32x32xf32>
      %124 = arith.addf %116, %123 : vector<32x32xf32>
      %c16_i32 = arith.constant 16 : i32
      %125 = vector.broadcast %c16_i32 : i32 to vector<32x16xi32>
      %126 = arith.addi %115, %125 : vector<32x16xi32>
      %127 = arith.cmpi eq, %114, %126 : vector<32x16xi32>
      %128 = arith.extui %127 : vector<32x16xi1> to vector<32x16xi32>
      %129 = arith.sitofp %128 : vector<32x16xi32> to vector<32x16xf32>
      %cst_75 = arith.constant dense<0.000000e+00> : vector<32x16xf32>
      %130 = tpu.matmul %129, %104, %cst_75 {dimension_numbers = #tpu.dot_dimension_numbers<[1], [0], [0], [1], [0, 0, 1, 1], [], []>} : vector<32x16xf32>, vector<16x16xf32>, vector<32x16xf32> -> vector<32x16xf32>
      %cst_76 = arith.constant dense<0.000000e+00> : vector<32x32xf32>
      %131 = tpu.matmul %130, %129, %cst_76 {dimension_numbers = #tpu.dot_dimension_numbers<[1], [1], [0], [0], [0, 0, 1, 0], [], []>} : vector<32x16xf32>, vector<32x16xf32>, vector<32x32xf32> -> vector<32x32xf32>
      %132 = arith.addf %124, %131 : vector<32x32xf32>
      %c0_77 = arith.constant 0 : index
      %c0_78 = arith.constant 0 : index
      %c0_79 = arith.constant 0 : index
      %133 = vector.load %arg8[%c0_77, %c0_78, %c0_79] : memref<2x32x32xf32, #tpu.memory_space<vmem>>, vector<1x32x32xf32>
      %134 = vector.shape_cast %133 : vector<1x32x32xf32> to vector<32x32xf32>
      %135 = vector.shape_cast %132 : vector<32x32xf32> to vector<1x32x32xf32>
      tpu.vector_store %arg8[%c0_77, %c0_78, %c0_79], %135 {strides = array<i32>} : memref<2x32x32xf32, #tpu.memory_space<vmem>>, vector<1x32x32xf32>,
      %cst_80 = arith.constant 0.000000e+00 : f32
      %136 = vector.broadcast %cst_80 : f32 to vector<32x32xf32>
      %c0_i32_81 = arith.constant 0 : i32
      %137 = vector.broadcast %c0_i32_81 : i32 to vector<32x16xi32>
      %138 = arith.addi %115, %137 : vector<32x16xi32>
      %139 = arith.cmpi eq, %114, %138 : vector<32x16xi32>
      %140 = arith.extui %139 : vector<32x16xi1> to vector<32x16xi32>
      %141 = arith.sitofp %140 : vector<32x16xi32> to vector<32x16xf32>
      %cst_82 = arith.constant dense<0.000000e+00> : vector<32x16xf32>
      %142 = tpu.matmul %141, %113, %cst_82 {dimension_numbers = #tpu.dot_dimension_numbers<[1], [0], [0], [1], [0, 0, 1, 1], [], []>} : vector<32x16xf32>, vector<16x16xf32>, vector<32x16xf32> -> vector<32x16xf32>
      %cst_83 = arith.constant dense<0.000000e+00> : vector<32x32xf32>
      %143 = tpu.matmul %142, %141, %cst_83 {dimension_numbers = #tpu.dot_dimension_numbers<[1], [1], [0], [0], [0, 0, 1, 0], [], []>} : vector<32x16xf32>, vector<32x16xf32>, vector<32x32xf32> -> vector<32x32xf32>
      %144 = arith.addf %136, %143 : vector<32x32xf32>
      %c16_i32_84 = arith.constant 16 : i32
      %145 = vector.broadcast %c16_i32_84 : i32 to vector<32x16xi32>
      %146 = arith.addi %115, %145 : vector<32x16xi32>
      %147 = arith.cmpi eq, %114, %146 : vector<32x16xi32>
      %148 = arith.extui %147 : vector<32x16xi1> to vector<32x16xi32>
      %149 = arith.sitofp %148 : vector<32x16xi32> to vector<32x16xf32>
      %cst_85 = arith.constant dense<0.000000e+00> : vector<32x16xf32>
      %150 = tpu.matmul %149, %113, %cst_85 {dimension_numbers = #tpu.dot_dimension_numbers<[1], [0], [0], [1], [0, 0, 1, 1], [], []>} : vector<32x16xf32>, vector<16x16xf32>, vector<32x16xf32> -> vector<32x16xf32>
      %cst_86 = arith.constant dense<0.000000e+00> : vector<32x32xf32>
      %151 = tpu.matmul %150, %149, %cst_86 {dimension_numbers = #tpu.dot_dimension_numbers<[1], [1], [0], [0], [0, 0, 1, 0], [], []>} : vector<32x16xf32>, vector<32x16xf32>, vector<32x32xf32> -> vector<32x32xf32>
      %152 = arith.addf %144, %151 : vector<32x32xf32>
      %c1_87 = arith.constant 1 : index
      %c0_88 = arith.constant 0 : index
      %c0_89 = arith.constant 0 : index
      %153 = vector.load %arg8[%c1_87, %c0_88, %c0_89] : memref<2x32x32xf32, #tpu.memory_space<vmem>>, vector<1x32x32xf32>
      %154 = vector.shape_cast %153 : vector<1x32x32xf32> to vector<32x32xf32>
      %155 = vector.shape_cast %152 : vector<32x32xf32> to vector<1x32x32xf32>
      tpu.vector_store %arg8[%c1_87, %c0_88, %c0_89], %155 {strides = array<i32>} : memref<2x32x32xf32, #tpu.memory_space<vmem>>, vector<1x32x32xf32>,
      %c0_90 = arith.constant 0 : index
      %c0_91 = arith.constant 0 : index
      %156 = vector.load %arg3[%c0_90, %c0_91] : memref<32x32xf32, #tpu.memory_space<vmem>>, vector<32x32xf32>
      %c0_92 = arith.constant 0 : index
      %c0_93 = arith.constant 0 : index
      %157 = vector.load %arg9[%c0_92, %c0_93] : memref<32x32xf32, #tpu.memory_space<vmem>>, vector<32x32xf32>
      tpu.vector_store %arg9[%c0_92, %c0_93], %156 {strides = array<i32>} : memref<32x32xf32, #tpu.memory_space<vmem>>, vector<32x32xf32>,
    } else {
    }
    %c0 = arith.constant 0 : index
    %c0_1 = arith.constant 0 : index
    %c0_2 = arith.constant 0 : index
    %3 = vector.load %arg2[%c0, %c0_1, %c0_2] : memref<1x32x4xf32, #tpu.memory_space<vmem>>, vector<1x32x4xf32>
    %4 = vector.shape_cast %3 : vector<1x32x4xf32> to vector<32x4xf32>
    %c0_3 = arith.constant 0 : index
    %c0_4 = arith.constant 0 : index
    %5 = vector.load %arg9[%c0_3, %c0_4] : memref<32x32xf32, #tpu.memory_space<vmem>>, vector<32x32xf32>
    %c0_5 = arith.constant 0 : index
    %c0_6 = arith.constant 0 : index
    %6 = vector.load %arg6[%c0_5, %c0_6] : memref<2x64xf32, #tpu.memory_space<vmem>>, vector<2x64xf32>
    %7 = vector.extract_strided_slice %6 {offsets = [0, 0], sizes = [1, 64], strides = [1, 1]} : vector<2x64xf32> to vector<1x64xf32>
    %8 = vector.extract_strided_slice %6 {offsets = [1, 0], sizes = [1, 32], strides = [1, 1]} : vector<2x64xf32> to vector<1x32xf32>
    %c0_7 = arith.constant 0 : index
    %c0_8 = arith.constant 0 : index
    %c0_9 = arith.constant 0 : index
    %9 = vector.load %arg4[%c0_7, %c0_8, %c0_9] : memref<3x4x96xf32, #tpu.memory_space<vmem>>, vector<1x4x96xf32>
    %10 = vector.shape_cast %9 : vector<1x4x96xf32> to vector<4x96xf32>
    %cst = arith.constant dense<0.000000e+00> : vector<32x96xf32>
    %11 = tpu.matmul %4, %10, %cst {dimension_numbers = #tpu.dot_dimension_numbers<[1], [0], [0], [1], [0, 0, 1, 1], [], []>} : vector<32x4xf32>, vector<4x96xf32>, vector<32x96xf32> -> vector<32x96xf32>
    %c1 = arith.constant 1 : index
    %c0_10 = arith.constant 0 : index
    %c0_11 = arith.constant 0 : index
    %12 = vector.load %arg4[%c1, %c0_10, %c0_11] : memref<3x4x96xf32, #tpu.memory_space<vmem>>, vector<1x4x96xf32>
    %13 = vector.shape_cast %12 : vector<1x4x96xf32> to vector<4x96xf32>
    %cst_12 = arith.constant dense<0.000000e+00> : vector<32x96xf32>
    %14 = tpu.matmul %4, %13, %cst_12 {dimension_numbers = #tpu.dot_dimension_numbers<[1], [0], [0], [1], [0, 0, 1, 1], [], []>} : vector<32x4xf32>, vector<4x96xf32>, vector<32x96xf32> -> vector<32x96xf32>
    %c2 = arith.constant 2 : index
    %c0_13 = arith.constant 0 : index
    %c0_14 = arith.constant 0 : index
    %15 = vector.load %arg4[%c2, %c0_13, %c0_14] : memref<3x4x96xf32, #tpu.memory_space<vmem>>, vector<1x4x96xf32>
    %16 = vector.shape_cast %15 : vector<1x4x96xf32> to vector<4x96xf32>
    %cst_15 = arith.constant dense<0.000000e+00> : vector<32x96xf32>
    %17 = tpu.matmul %4, %16, %cst_15 {dimension_numbers = #tpu.dot_dimension_numbers<[1], [0], [0], [1], [0, 0, 1, 1], [], []>} : vector<32x4xf32>, vector<4x96xf32>, vector<32x96xf32> -> vector<32x96xf32>
    %18 = vector.extract_strided_slice %11 {offsets = [0, 0], sizes = [32, 64], strides = [1, 1]} : vector<32x96xf32> to vector<32x64xf32>
    %c0_16 = arith.constant 0 : index
    %c0_17 = arith.constant 0 : index
    %c0_18 = arith.constant 0 : index
    %19 = vector.load %arg5[%c0_16, %c0_17, %c0_18] : memref<3x32x96xf32, #tpu.memory_space<vmem>>, vector<1x32x96xf32>
    %20 = vector.shape_cast %19 : vector<1x32x96xf32> to vector<32x96xf32>
    %21 = vector.extract_strided_slice %20 {offsets = [0, 0], sizes = [32, 64], strides = [1, 1]} : vector<32x96xf32> to vector<32x64xf32>
    %cst_19 = arith.constant dense<0.000000e+00> : vector<32x64xf32>
    %22 = tpu.matmul %5, %21, %cst_19 {dimension_numbers = #tpu.dot_dimension_numbers<[1], [0], [0], [1], [0, 0, 1, 1], [], []>} : vector<32x32xf32>, vector<32x64xf32>, vector<32x64xf32> -> vector<32x64xf32>
    %23 = arith.addf %18, %22 : vector<32x64xf32>
    %24 = vector.extract_strided_slice %14 {offsets = [0, 0], sizes = [32, 64], strides = [1, 1]} : vector<32x96xf32> to vector<32x64xf32>
    %c1_20 = arith.constant 1 : index
    %c0_21 = arith.constant 0 : index
    %c0_22 = arith.constant 0 : index
    %25 = vector.load %arg5[%c1_20, %c0_21, %c0_22] : memref<3x32x96xf32, #tpu.memory_space<vmem>>, vector<1x32x96xf32>
    %26 = vector.shape_cast %25 : vector<1x32x96xf32> to vector<32x96xf32>
    %27 = vector.extract_strided_slice %26 {offsets = [0, 0], sizes = [32, 64], strides = [1, 1]} : vector<32x96xf32> to vector<32x64xf32>
    %cst_23 = arith.constant dense<0.000000e+00> : vector<32x64xf32>
    %28 = tpu.matmul %5, %27, %cst_23 {dimension_numbers = #tpu.dot_dimension_numbers<[1], [0], [0], [1], [0, 0, 1, 1], [], []>} : vector<32x32xf32>, vector<32x64xf32>, vector<32x64xf32> -> vector<32x64xf32>
    %29 = arith.addf %24, %28 : vector<32x64xf32>
    %30 = vector.extract_strided_slice %17 {offsets = [0, 0], sizes = [32, 64], strides = [1, 1]} : vector<32x96xf32> to vector<32x64xf32>
    %c2_24 = arith.constant 2 : index
    %c0_25 = arith.constant 0 : index
    %c0_26 = arith.constant 0 : index
    %31 = vector.load %arg5[%c2_24, %c0_25, %c0_26] : memref<3x32x96xf32, #tpu.memory_space<vmem>>, vector<1x32x96xf32>
    %32 = vector.shape_cast %31 : vector<1x32x96xf32> to vector<32x96xf32>
    %33 = vector.extract_strided_slice %32 {offsets = [0, 0], sizes = [32, 64], strides = [1, 1]} : vector<32x96xf32> to vector<32x64xf32>
    %cst_27 = arith.constant dense<0.000000e+00> : vector<32x64xf32>
    %34 = tpu.matmul %5, %33, %cst_27 {dimension_numbers = #tpu.dot_dimension_numbers<[1], [0], [0], [1], [0, 0, 1, 1], [], []>} : vector<32x32xf32>, vector<32x64xf32>, vector<32x64xf32> -> vector<32x64xf32>
    %35 = arith.addf %30, %34 : vector<32x64xf32>
    %c0_28 = arith.constant 0 : index
    %c0_29 = arith.constant 0 : index
    %c0_30 = arith.constant 0 : index
    %36 = vector.load %arg8[%c0_28, %c0_29, %c0_30] : memref<2x32x32xf32, #tpu.memory_space<vmem>>, vector<1x32x32xf32>
    %37 = vector.shape_cast %36 : vector<1x32x32xf32> to vector<32x32xf32>
    %cst_31 = arith.constant dense<0.000000e+00> : vector<32x64xf32>
    %38 = tpu.matmul %37, %29, %cst_31 {dimension_numbers = #tpu.dot_dimension_numbers<[1], [0], [0], [1], [0, 0, 1, 1], [], []>} : vector<32x32xf32>, vector<32x64xf32>, vector<32x64xf32> -> vector<32x64xf32>
    %39 = arith.addf %23, %38 : vector<32x64xf32>
    %c1_32 = arith.constant 1 : index
    %c0_33 = arith.constant 0 : index
    %c0_34 = arith.constant 0 : index
    %40 = vector.load %arg8[%c1_32, %c0_33, %c0_34] : memref<2x32x32xf32, #tpu.memory_space<vmem>>, vector<1x32x32xf32>
    %41 = vector.shape_cast %40 : vector<1x32x32xf32> to vector<32x32xf32>
    %cst_35 = arith.constant dense<0.000000e+00> : vector<32x64xf32>
    %42 = tpu.matmul %41, %35, %cst_35 {dimension_numbers = #tpu.dot_dimension_numbers<[1], [0], [0], [1], [0, 0, 1, 1], [], []>} : vector<32x32xf32>, vector<32x64xf32>, vector<32x64xf32> -> vector<32x64xf32>
    %43 = arith.addf %39, %42 : vector<32x64xf32>
    %44 = vector.broadcast %7 : vector<1x64xf32> to vector<32x64xf32>
    %45 = arith.addf %43, %44 : vector<32x64xf32>
    %46 = arith.negf %45 : vector<32x64xf32>
    %47 = math.exp %46 : vector<32x64xf32>
    %cst_36 = arith.constant 1.000000e+00 : f32
    %48 = vector.broadcast %cst_36 : f32 to vector<32x64xf32>
    %49 = arith.addf %48, %47 : vector<32x64xf32>
    %50 = arith.divf %48, %49 : vector<32x64xf32>
    %51 = vector.extract_strided_slice %50 {offsets = [0, 0], sizes = [32, 32], strides = [1, 1]} : vector<32x64xf32> to vector<32x32xf32>
    %52 = vector.extract_strided_slice %50 {offsets = [0, 32], sizes = [32, 32], strides = [1, 1]} : vector<32x64xf32> to vector<32x32xf32>
    %53 = arith.mulf %51, %5 : vector<32x32xf32>
    %54 = vector.extract_strided_slice %11 {offsets = [0, 64], sizes = [32, 32], strides = [1, 1]} : vector<32x96xf32> to vector<32x32xf32>
    %c0_37 = arith.constant 0 : index
    %c0_38 = arith.constant 0 : index
    %c0_39 = arith.constant 0 : index
    %55 = vector.load %arg5[%c0_37, %c0_38, %c0_39] : memref<3x32x96xf32, #tpu.memory_space<vmem>>, vector<1x32x96xf32>
    %56 = vector.shape_cast %55 : vector<1x32x96xf32> to vector<32x96xf32>
    %57 = vector.extract_strided_slice %56 {offsets = [0, 64], sizes = [32, 32], strides = [1, 1]} : vector<32x96xf32> to vector<32x32xf32>
    %cst_40 = arith.constant dense<0.000000e+00> : vector<32x32xf32>
    %58 = tpu.matmul %53, %57, %cst_40 {dimension_numbers = #tpu.dot_dimension_numbers<[1], [0], [0], [1], [0, 0, 1, 1], [], []>} : vector<32x32xf32>, vector<32x32xf32>, vector<32x32xf32> -> vector<32x32xf32>
    %59 = arith.addf %54, %58 : vector<32x32xf32>
    %60 = vector.extract_strided_slice %14 {offsets = [0, 64], sizes = [32, 32], strides = [1, 1]} : vector<32x96xf32> to vector<32x32xf32>
    %c1_41 = arith.constant 1 : index
    %c0_42 = arith.constant 0 : index
    %c0_43 = arith.constant 0 : index
    %61 = vector.load %arg5[%c1_41, %c0_42, %c0_43] : memref<3x32x96xf32, #tpu.memory_space<vmem>>, vector<1x32x96xf32>
    %62 = vector.shape_cast %61 : vector<1x32x96xf32> to vector<32x96xf32>
    %63 = vector.extract_strided_slice %62 {offsets = [0, 64], sizes = [32, 32], strides = [1, 1]} : vector<32x96xf32> to vector<32x32xf32>
    %cst_44 = arith.constant dense<0.000000e+00> : vector<32x32xf32>
    %64 = tpu.matmul %53, %63, %cst_44 {dimension_numbers = #tpu.dot_dimension_numbers<[1], [0], [0], [1], [0, 0, 1, 1], [], []>} : vector<32x32xf32>, vector<32x32xf32>, vector<32x32xf32> -> vector<32x32xf32>
    %65 = arith.addf %60, %64 : vector<32x32xf32>
    %66 = vector.extract_strided_slice %17 {offsets = [0, 64], sizes = [32, 32], strides = [1, 1]} : vector<32x96xf32> to vector<32x32xf32>
    %c2_45 = arith.constant 2 : index
    %c0_46 = arith.constant 0 : index
    %c0_47 = arith.constant 0 : index
    %67 = vector.load %arg5[%c2_45, %c0_46, %c0_47] : memref<3x32x96xf32, #tpu.memory_space<vmem>>, vector<1x32x96xf32>
    %68 = vector.shape_cast %67 : vector<1x32x96xf32> to vector<32x96xf32>
    %69 = vector.extract_strided_slice %68 {offsets = [0, 64], sizes = [32, 32], strides = [1, 1]} : vector<32x96xf32> to vector<32x32xf32>
    %cst_48 = arith.constant dense<0.000000e+00> : vector<32x32xf32>
    %70 = tpu.matmul %53, %69, %cst_48 {dimension_numbers = #tpu.dot_dimension_numbers<[1], [0], [0], [1], [0, 0, 1, 1], [], []>} : vector<32x32xf32>, vector<32x32xf32>, vector<32x32xf32> -> vector<32x32xf32>
    %71 = arith.addf %66, %70 : vector<32x32xf32>
    %c0_49 = arith.constant 0 : index
    %c0_50 = arith.constant 0 : index
    %c0_51 = arith.constant 0 : index
    %72 = vector.load %arg8[%c0_49, %c0_50, %c0_51] : memref<2x32x32xf32, #tpu.memory_space<vmem>>, vector<1x32x32xf32>
    %73 = vector.shape_cast %72 : vector<1x32x32xf32> to vector<32x32xf32>
    %cst_52 = arith.constant dense<0.000000e+00> : vector<32x32xf32>
    %74 = tpu.matmul %73, %65, %cst_52 {dimension_numbers = #tpu.dot_dimension_numbers<[1], [0], [0], [1], [0, 0, 1, 1], [], []>} : vector<32x32xf32>, vector<32x32xf32>, vector<32x32xf32> -> vector<32x32xf32>
    %75 = arith.addf %59, %74 : vector<32x32xf32>
    %c1_53 = arith.constant 1 : index
    %c0_54 = arith.constant 0 : index
    %c0_55 = arith.constant 0 : index
    %76 = vector.load %arg8[%c1_53, %c0_54, %c0_55] : memref<2x32x32xf32, #tpu.memory_space<vmem>>, vector<1x32x32xf32>
    %77 = vector.shape_cast %76 : vector<1x32x32xf32> to vector<32x32xf32>
    %cst_56 = arith.constant dense<0.000000e+00> : vector<32x32xf32>
    %78 = tpu.matmul %77, %71, %cst_56 {dimension_numbers = #tpu.dot_dimension_numbers<[1], [0], [0], [1], [0, 0, 1, 1], [], []>} : vector<32x32xf32>, vector<32x32xf32>, vector<32x32xf32> -> vector<32x32xf32>
    %79 = arith.addf %75, %78 : vector<32x32xf32>
    %80 = vector.broadcast %8 : vector<1x32xf32> to vector<32x32xf32>
    %81 = arith.addf %79, %80 : vector<32x32xf32>
    %82 = math.tanh %81 : vector<32x32xf32>
    %83 = arith.mulf %52, %5 : vector<32x32xf32>
    %cst_57 = arith.constant 1.000000e+00 : f32
    %84 = vector.broadcast %cst_57 : f32 to vector<32x32xf32>
    %85 = arith.subf %84, %52 : vector<32x32xf32>
    %86 = arith.mulf %85, %82 : vector<32x32xf32>
    %87 = arith.addf %83, %86 : vector<32x32xf32>
    %c0_58 = arith.constant 0 : index
    %c0_59 = arith.constant 0 : index
    %c0_60 = arith.constant 0 : index
    %88 = vector.load %arg7[%c0_58, %c0_59, %c0_60] : memref<1x32x32xf32, #tpu.memory_space<vmem>>, vector<1x32x32xf32>
    %89 = vector.shape_cast %88 : vector<1x32x32xf32> to vector<32x32xf32>
    %90 = vector.shape_cast %87 : vector<32x32xf32> to vector<1x32x32xf32>
    tpu.vector_store %arg7[%c0_58, %c0_59, %c0_60], %90 {strides = array<i32>} : memref<1x32x32xf32, #tpu.memory_space<vmem>>, vector<1x32x32xf32>,
    %c0_61 = arith.constant 0 : index
    %c0_62 = arith.constant 0 : index
    %91 = vector.load %arg9[%c0_61, %c0_62] : memref<32x32xf32, #tpu.memory_space<vmem>>, vector<32x32xf32>
    tpu.vector_store %arg9[%c0_61, %c0_62], %87 {strides = array<i32>} : memref<32x32xf32, #tpu.memory_space<vmem>>, vector<32x32xf32>,
    return
  }
  func.func @transform_0(%arg0: i32) -> (i32, i32) {
    %c0_i32 = arith.constant 0 : i32
    %c0_i32_0 = arith.constant 0 : i32
    %c0_i32_1 = arith.constant 0 : i32
    return %c0_i32, %c0_i32_0 : i32, i32
  }
  func.func @transform_1(%arg0: i32) -> (i32, i32, i32) {
    %c0_i32 = arith.constant 0 : i32
    %c0_i32_0 = arith.constant 0 : i32
    %c0_i32_1 = arith.constant 0 : i32
    return %arg0, %c0_i32, %c0_i32_0 : i32, i32, i32
  }
  func.func @transform_2(%arg0: i32) -> (i32, i32) {
    %c0_i32 = arith.constant 0 : i32
    %c0_i32_0 = arith.constant 0 : i32
    %c0_i32_1 = arith.constant 0 : i32
    return %c0_i32, %c0_i32_0 : i32, i32
  }
  func.func @transform_3(%arg0: i32) -> (i32, i32, i32) {
    %c0_i32 = arith.constant 0 : i32
    %c0_i32_0 = arith.constant 0 : i32
    %c0_i32_1 = arith.constant 0 : i32
    %c0_i32_2 = arith.constant 0 : i32
    return %c0_i32, %c0_i32_0, %c0_i32_1 : i32, i32, i32
  }
  func.func @transform_4(%arg0: i32) -> (i32, i32, i32) {
    %c0_i32 = arith.constant 0 : i32
    %c0_i32_0 = arith.constant 0 : i32
    %c0_i32_1 = arith.constant 0 : i32
    %c0_i32_2 = arith.constant 0 : i32
    return %c0_i32, %c0_i32_0, %c0_i32_1 : i32, i32, i32
  }
  func.func @transform_5(%arg0: i32) -> (i32, i32) {
    %c0_i32 = arith.constant 0 : i32
    %c0_i32_0 = arith.constant 0 : i32
    %c0_i32_1 = arith.constant 0 : i32
    return %c0_i32, %c0_i32_0 : i32, i32
  }
  func.func @transform_6(%arg0: i32) -> (i32, i32, i32) {
    %c0_i32 = arith.constant 0 : i32
    %c0_i32_0 = arith.constant 0 : i32
    %c0_i32_1 = arith.constant 0 : i32
    return %arg0, %c0_i32, %c0_i32_0 : i32, i32, i32
  }
}

</mosaic_0001>

<llo_original>
// kernel: agcrn_cell_seq.1
$region0: #{agcrn_cell_seq.1}
  #allocation0 [shape = 'u32[]', space=smem, size = 0x4, offset = 0x4, fixed_abs, tag = 'smem constant byte address 0x4 - core index']
  #allocation1 [shape = 'u32[144,128]{1,0:T(1,128)}', space=vmem, size = 0x12000, scoped, tag = 'internal scratch']
  #allocation2 [shape = 'f32[2,32,32]{2,1,0:T(8,128)}', space=vmem, size = 0x8000, scoped, tag = 'scratch operand']
  #allocation3 [shape = 'f32[32,32]{1,0:T(8,128)}', space=vmem, size = 0x4000, scoped, tag = 'scratch operand']
  %s0 = inlined_call_operand.vmem [shape: f32[16,8], index: 0, kind: input, shape index: {}]
  %s1 = inlined_call_operand.vmem [shape: f32[1,32,4], index: 1, kind: input, shape index: {}]
  %s2 = inlined_call_operand.vmem [shape: f32[32,32], index: 2, kind: input, shape index: {}]
  %s3 = inlined_call_operand.vmem [shape: f32[3,4,96], index: 3, kind: input, shape index: {}]
  %s4 = inlined_call_operand.vmem [shape: f32[3,32,96], index: 4, kind: input, shape index: {}]
  %s5 = inlined_call_operand.vmem [shape: f32[2,64], index: 5, kind: input, shape index: {}]
  %s6 = inlined_call_operand.hbm [shape: f32[1,32,32], index: 6, kind: output, shape index: {}]
  %s7 = sld [smem:[#allocation0]]
  $region38: #{agcrn_cell_seq.1} parent=0
    _
  %s9 = ssub.s32 1, %s7
  %s10 = scalar_select 0, %s9, %s7
  $region1: #{agcrn_cell_seq.1} parent=0
    #allocation4 [shape = 'u8[16384]{0}', space=vmem, size = 0x4000, scoped, tag = 'output window, operand 0, single buffered']
    #allocation5 [shape = 's32[1]{0}', space=sflag, size = 0x4, scoped, tag = 'scoped memory for agcrn_cell_seq.1']
    %11 = vsyncpa [#allocation5], 0
    // Predicated region
    $region2: #{agcrn_cell_seq.1} parent=1 // pred_check
      _
    $region3: #{agcrn_cell_seq.1} parent=1 // pred_check_branch
      %13 = sbr.rel (0) target = $region5
    $region4: #{agcrn_cell_seq.1} parent=1 // pred_region
      _
    $region5: #{agcrn_cell_seq.1} parent=1 // pred_fallthru
      _
    // Predicated region
    $region6: #{agcrn_cell_seq.1} parent=1 // pred_check
      _
    $region7: #{agcrn_cell_seq.1} parent=1 // pred_check_branch
      %15 = sbr.rel (0) target = $region9
    $region8: #{agcrn_cell_seq.1} parent=1 // pred_region
      _
    $region9: #{agcrn_cell_seq.1} parent=1 // pred_fallthru
      _
    // Predicated region
    $region10: #{agcrn_cell_seq.1} parent=1 // pred_check
      _
    $region11: #{agcrn_cell_seq.1} parent=1 // pred_check_branch
      %17 = sbr.rel (0) target = $region13
    $region12: #{agcrn_cell_seq.1} parent=1 // pred_region
      _
    $region13: #{agcrn_cell_seq.1} parent=1 // pred_fallthru
      _
    // Predicated region
    $region14: #{agcrn_cell_seq.1} parent=1 // pred_check
      _
    $region15: #{agcrn_cell_seq.1} parent=1 // pred_check_branch
      %19 = sbr.rel (0) target = $region17
    $region16: #{agcrn_cell_seq.1} parent=1 // pred_region
      _
    $region17: #{agcrn_cell_seq.1} parent=1 // pred_fallthru
      _
    // Predicated region
    $region18: #{agcrn_cell_seq.1} parent=1 // pred_check
      _
    $region19: #{agcrn_cell_seq.1} parent=1 // pred_check_branch
      %21 = sbr.rel (0) target = $region21
    $region20: #{agcrn_cell_seq.1} parent=1 // pred_region
      _
    $region21: #{agcrn_cell_seq.1} parent=1 // pred_fallthru
      _
    // Predicated region
    $region22: #{agcrn_cell_seq.1} parent=1 // pred_check
      _
    $region23: #{agcrn_cell_seq.1} parent=1 // pred_check_branch
      %23 = sbr.rel (0) target = $region25
    $region24: #{agcrn_cell_seq.1} parent=1 // pred_region
      _
    $region25: #{agcrn_cell_seq.1} parent=1 // pred_fallthru
      _
    %p24 = scmp.eq.s32.totalorder 0, 0
    // Predicated region
    $region26: #{agcrn_cell_seq.1} parent=1 // pred_check
      %p25 = pneg %p24
    $region27: #{agcrn_cell_seq.1} parent=1 // pred_check_branch
      %27 = sbr.rel (%p25) target = $region29
    $region28: #{agcrn_cell_seq.1} parent=1 // pred_region
      %v28 = vld [vmem:[%s0] sm:$0xff]
      %v29 = vld [vmem:[%s0 + $0x8] sm:$0xff]
      %vm30 = vcmask 64512
      %v32 = vsel %vm30, %v28, 0
      %v35 = vsel %vm30, %v29, 0
      %37 = vmatprep.subr.mxu0 0.0
      %38 = vmatpush1.xpose.msra.mxu0 %v32
      %39 = vmatprep.subr.mxu0 0.0
      %40 = vmatpush1.xpose.msra.mxu0 %v35
      %41 = vmatprep.subr.mxu0 0.0
      %42 = vmatpush1.xpose.msra.mxu0 0.0
      %43 = vmatprep.subr.mxu0 0.0
      %44 = vmatpush1.xpose.msra.mxu0 0.0
      %45 = vmatprep.subr.mxu0 0.0
      %46 = vmatpush1.xpose.msra.mxu0 0.0
      %47 = vmatprep.subr.mxu0 0.0
      %48 = vmatpush1.xpose.msra.mxu0 0.0
      %49 = vmatprep.subr.mxu0 0.0
      %50 = vmatpush1.xpose.msra.mxu0 0.0
      %51 = vmatprep.subr.mxu0 0.0
      %52 = vmatpush1.xpose.msra.mxu0 0.0
      %53 = vmatprep.subr.mxu0 0.0
      %54 = vmatpush1.xpose.msra.mxu0 0.0
      %55 = vmatprep.subr.mxu0 0.0
      %56 = vmatpush1.xpose.msra.mxu0 0.0
      %57 = vmatprep.subr.mxu0 0.0
      %58 = vmatpush1.xpose.msra.mxu0 0.0
      %59 = vmatprep.subr.mxu0 0.0
      %60 = vmatpush1.xpose.msra.mxu0 0.0
      %61 = vmatprep.subr.mxu0 0.0
      %62 = vmatpush1.xpose.msra.mxu0 0.0
      %63 = vmatprep.subr.mxu0 0.0
      %64 = vmatpush1.xpose.msra.mxu0 0.0
      %65 = vmatprep.subr.mxu0 0.0
      %66 = vmatpush1.xpose.msra.mxu0 0.0
      %67 = vmatprep.subr.mxu0 0.0
      %68 = vmatpush1.xpose.msra.mxu0 0.0
      %69 = vmatprep.subr.mxu0 0.0
      %70 = vmatpush1.xpose.msra.mxu0 0.0
      %71 = vmatprep.subr.mxu0 0.0
      %72 = vmatpush1.xpose.msra.mxu0 0.0
      %73 = vmatprep.subr.mxu0 0.0
      %74 = vmatpush1.xpose.msra.mxu0 0.0
      %75 = vmatprep.subr.mxu0 0.0
      %76 = vmatpush1.xpose.msra.mxu0 0.0
      %77 = vmatprep.subr.mxu0 0.0
      %78 = vmatpush1.xpose.msra.mxu0 0.0
      %79 = vmatprep.subr.mxu0 0.0
      %80 = vmatpush1.xpose.msra.mxu0 0.0
      %81 = vmatprep.subr.mxu0 0.0
      %82 = vmatpush1.xpose.msra.mxu0 0.0
      %83 = vmatprep.subr.mxu0 0.0
      %84 = vmatpush1.xpose.msra.mxu0 0.0
      %85 = vmatprep.subr.mxu0 0.0
      %86 = vmatpush1.xpose.msra.mxu0 0.0
      %87 = vmatprep.subr.mxu0 0.0
      %88 = vmatpush1.xpose.msra.mxu0 0.0
      %89 = vmatprep.subr.mxu0 0.0
      %90 = vmatpush1.xpose.msra.mxu0 0.0
      %91 = vmatprep.subr.mxu0 0.0
      %92 = vmatpush1.xpose.msra.mxu0 0.0
      %93 = vmatprep.subr.mxu0 0.0
      %94 = vmatpush1.xpose.msra.mxu0 0.0
      %95 = vmatprep.subr.mxu0 0.0
      %96 = vmatpush1.xpose.msra.mxu0 0.0
      %97 = vmatprep.subr.mxu0 0.0
      %98 = vmatpush1.xpose.msra.mxu0 0.0
      %99 = vmatprep.subr.mxu0 0.0
      %100 = vmatpush1.xpose.msra.mxu0 0.0
      %101 = vmatprep.mubr.f32.mxu0 0.0
      %102 = vmatmul.mubr.f32.gmra.mrb[0].mxu0 %v32
      %v103 = vpop.f32.mrb[0].mxu0
      %v104 = vadd.f32 0.0, %v103
      %v105 = vpop.f32.mrb[0].mxu0
      %106 = vmatprep.mubr.f32.mxu0 0.0
      %107 = vmatmul.mubr.f32.gmra.mrb[0].mxu0 %v35
      %v108 = vpop.f32.mrb[0].mxu0
      %v109 = vadd.f32 0.0, %v108
      %v110 = vpop.f32.mrb[0].mxu0
      %111 = vdwg.mxu0
      %v112 = vmax.f32 %v104, 0.0
      %v113 = vmax.f32 %v109, 0.0
      %vm114 = vcmask 130048
      %v115 = vsel %vm114, %v112, -inf
      %116 = vmax.xlane.f32.xlu0 %v115
      %v117 = vpop.xlane.xlu0 %116
      %v118 = vsel %vm114, %v113, -inf
      %119 = vmax.xlane.f32.xlu0 %v118
      %v120 = vpop.xlane.xlu0 %119
      %v121 = vsub.f32 %v112, %v117
      %v122 = vsub.f32 %v113, %v120
      %v123 = vmul.f32 %v121, 1.442695
      %v124 = vpow.pop %v123
      %v125 = vmul.f32 %v122, 1.442695
      %v126 = vpow.pop %v125
      %v127 = vsel %vm114, %v124, 0.0
      %128 = vadd.xlane.f32.xlu0 %v127
      %v129 = vpop.xlane.xlu0 %128
      %v130 = vsel %vm114, %v126, 0.0
      %131 = vadd.xlane.f32.xlu0 %v130
      %v132 = vpop.xlane.xlu0 %131
      %v133 = vrcp.pop %v129
      %v134 = vmul.f32 %v124, %v133
      %v135 = vrcp.pop %v132
      %v136 = vmul.f32 %v126, %v135
      %v137 = vlaneseq
      %v138 = vshrl.u32 %v137, 7
      %v139 = vadd.s32 %v138, 8
      %v140 = vlaneseq
      %v141 = vand.u32 %v140, 127
      %vm142 = vcmp.eq.s32.totalorder %v138, %v141
      %vm143 = vcmp.eq.s32.totalorder %v139, %v141
      %v144 = vsel %vm142, 1, 0
      %v145 = vsel %vm143, 1, 0
      %v146 = vcvt.s32.f32 %v144
      %v147 = vcvt.s32.f32 %v145
      %v149 = vsel %vm114, %v134, 0
      %v152 = vsel %vm114, %v136, 0
      %154 = vmatprep.subr.mxu0 0.0
      %155 = vmatpush1.msra.mxu0 %v134
      %156 = vmatprep.subr.mxu0 0.0
      %157 = vmatpush1.msra.mxu0 %v136
      %158 = vmatprep.subr.mxu0 0.0
      %159 = vmatpush1.msra.mxu0 0.0
      %160 = vmatprep.subr.mxu0 0.0
      %161 = vmatpush1.msra.mxu0 0.0
      %162 = vmatprep.subr.mxu0 0.0
      %163 = vmatpush1.msra.mxu0 0.0
      %164 = vmatprep.subr.mxu0 0.0
      %165 = vmatpush1.msra.mxu0 0.0
      %166 = vmatprep.subr.mxu0 0.0
      %167 = vmatpush1.msra.mxu0 0.0
      %168 = vmatprep.subr.mxu0 0.0
      %169 = vmatpush1.msra.mxu0 0.0
      %170 = vmatprep.subr.mxu0 0.0
      %171 = vmatpush1.msra.mxu0 0.0
      %172 = vmatprep.subr.mxu0 0.0
      %173 = vmatpush1.msra.mxu0 0.0
      %174 = vmatprep.subr.mxu0 0.0
      %175 = vmatpush1.msra.mxu0 0.0
      %176 = vmatprep.subr.mxu0 0.0
      %177 = vmatpush1.msra.mxu0 0.0
      %178 = vmatprep.subr.mxu0 0.0
      %179 = vmatpush1.msra.mxu0 0.0
      %180 = vmatprep.subr.mxu0 0.0
      %181 = vmatpush1.msra.mxu0 0.0
      %182 = vmatprep.subr.mxu0 0.0
      %183 = vmatpush1.msra.mxu0 0.0
      %184 = vmatprep.subr.mxu0 0.0
      %185 = vmatpush1.msra.mxu0 0.0
      %186 = vmatprep.subr.mxu0 0.0
      %187 = vmatpush1.msra.mxu0 0.0
      %188 = vmatprep.subr.mxu0 0.0
      %189 = vmatpush1.msra.mxu0 0.0
      %190 = vmatprep.subr.mxu0 0.0
      %191 = vmatpush1.msra.mxu0 0.0
      %192 = vmatprep.subr.mxu0 0.0
      %193 = vmatpush1.msra.mxu0 0.0
      %194 = vmatprep.subr.mxu0 0.0
      %195 = vmatpush1.msra.mxu0 0.0
      %196 = vmatprep.subr.mxu0 0.0
      %197 = vmatpush1.msra.mxu0 0.0
      %198 = vmatprep.subr.mxu0 0.0
      %199 = vmatpush1.msra.mxu0 0.0
      %200 = vmatprep.subr.mxu0 0.0
      %201 = vmatpush1.msra.mxu0 0.0
      %202 = vmatprep.subr.mxu0 0.0
      %203 = vmatpush1.msra.mxu0 0.0
      %204 = vmatprep.subr.mxu0 0.0
      %205 = vmatpush1.msra.mxu0 0.0
      %206 = vmatprep.subr.mxu0 0.0
      %207 = vmatpush1.msra.mxu0 0.0
      %208 = vmatprep.subr.mxu0 0.0
      %209 = vmatpush1.msra.mxu0 0.0
      %210 = vmatprep.subr.mxu0 0.0
      %211 = vmatpush1.msra.mxu0 0.0
      %212 = vmatprep.subr.mxu0 0.0
      %213 = vmatpush1.msra.mxu0 0.0
      %214 = vmatprep.subr.mxu0 0.0
      %215 = vmatpush1.msra.mxu0 0.0
      %216 = vmatprep.subr.mxu0 0.0
      %217 = vmatpush1.msra.mxu0 0.0
      %218 = vmatprep.mubr.f32.mxu0 0.0
      %219 = vmatmul.mubr.f32.gmra.mrb[0].mxu0 %v149
      %v220 = vpop.f32.mrb[0].mxu0
      %v221 = vadd.f32 0.0, %v220
      %v222 = vpop.f32.mrb[0].mxu0
      %223 = vmatprep.mubr.f32.mxu0 0.0
      %224 = vmatmul.mubr.f32.gmra.mrb[0].mxu0 %v152
      %v225 = vpop.f32.mrb[0].mxu0
      %v226 = vadd.f32 0.0, %v225
      %v227 = vpop.f32.mrb[0].mxu0
      %228 = vdwg.mxu0
      %v229 = vmul.f32 %v221, 2.0
      %v230 = vmul.f32 %v226, 2.0
      %v231 = vsub.f32 %v229, %v146
      %v232 = vsub.f32 %v230, %v147
      %v233 = vadd.s32 %v138, 16
      %v234 = vadd.s32 %v138, 24
      %vm235 = vcmp.eq.s32.totalorder %v233, %v141
      %vm236 = vcmp.eq.s32.totalorder %v234, %v141
      %v237 = vsel %vm235, 1, 0
      %v238 = vsel %vm236, 1, 0
      %v239 = vcvt.s32.f32 %v237
      %v240 = vcvt.s32.f32 %v238
      %v242 = vsel %vm114, %v146, 0
      %v245 = vsel %vm114, %v147, 0
      %v248 = vsel %vm114, %v239, 0
      %v251 = vsel %vm114, %v240, 0
      %253 = vmatprep.subr.mxu0 0.0
      %254 = vmatpush1.msra.mxu0 %v134
      %255 = vmatprep.subr.mxu0 0.0
      %256 = vmatpush1.msra.mxu0 %v136
      %257 = vmatprep.subr.mxu0 0.0
      %258 = vmatpush1.msra.mxu0 0.0
      %259 = vmatprep.subr.mxu0 0.0
      %260 = vmatpush1.msra.mxu0 0.0
      %261 = vmatprep.subr.mxu0 0.0
      %262 = vmatpush1.msra.mxu0 0.0
      %263 = vmatprep.subr.mxu0 0.0
      %264 = vmatpush1.msra.mxu0 0.0
      %265 = vmatprep.subr.mxu0 0.0
      %266 = vmatpush1.msra.mxu0 0.0
      %267 = vmatprep.subr.mxu0 0.0
      %268 = vmatpush1.msra.mxu0 0.0
      %269 = vmatprep.subr.mxu0 0.0
      %270 = vmatpush1.msra.mxu0 0.0
      %271 = vmatprep.subr.mxu0 0.0
      %272 = vmatpush1.msra.mxu0 0.0
      %273 = vmatprep.subr.mxu0 0.0
      %274 = vmatpush1.msra.mxu0 0.0
      %275 = vmatprep.subr.mxu0 0.0
      %276 = vmatpush1.msra.mxu0 0.0
      %277 = vmatprep.subr.mxu0 0.0
      %278 = vmatpush1.msra.mxu0 0.0
      %279 = vmatprep.subr.mxu0 0.0
      %280 = vmatpush1.msra.mxu0 0.0
      %281 = vmatprep.subr.mxu0 0.0
      %282 = vmatpush1.msra.mxu0 0.0
      %283 = vmatprep.subr.mxu0 0.0
      %284 = vmatpush1.msra.mxu0 0.0
      %285 = vmatprep.subr.mxu0 0.0
      %286 = vmatpush1.msra.mxu0 0.0
      %287 = vmatprep.subr.mxu0 0.0
      %288 = vmatpush1.msra.mxu0 0.0
      %289 = vmatprep.subr.mxu0 0.0
      %290 = vmatpush1.msra.mxu0 0.0
      %291 = vmatprep.subr.mxu0 0.0
      %292 = vmatpush1.msra.mxu0 0.0
      %293 = vmatprep.subr.mxu0 0.0
      %294 = vmatpush1.msra.mxu0 0.0
      %295 = vmatprep.subr.mxu0 0.0
      %296 = vmatpush1.msra.mxu0 0.0
      %297 = vmatprep.subr.mxu0 0.0
      %298 = vmatpush1.msra.mxu0 0.0
      %299 = vmatprep.subr.mxu0 0.0
      %300 = vmatpush1.msra.mxu0 0.0
      %301 = vmatprep.subr.mxu0 0.0
      %302 = vmatpush1.msra.mxu0 0.0
      %303 = vmatprep.subr.mxu0 0.0
      %304 = vmatpush1.msra.mxu0 0.0
      %305 = vmatprep.subr.mxu0 0.0
      %306 = vmatpush1.msra.mxu0 0.0
      %307 = vmatprep.subr.mxu0 0.0
      %308 = vmatpush1.msra.mxu0 0.0
      %309 = vmatprep.subr.mxu0 0.0
      %310 = vmatpush1.msra.mxu0 0.0
      %311 = vmatprep.subr.mxu0 0.0
      %312 = vmatpush1.msra.mxu0 0.0
      %313 = vmatprep.subr.mxu0 0.0
      %314 = vmatpush1.msra.mxu0 0.0
      %315 = vmatprep.subr.mxu0 0.0
      %316 = vmatpush1.msra.mxu0 0.0
      %317 = vmatprep.mubr.f32.mxu0 0.0
      %318 = vmatmul.mubr.f32.gmra.mrb[0].mxu0 %v242
      %v319 = vpop.f32.mrb[0].mxu0
      %v320 = vadd.f32 0.0, %v319
      %v321 = vpop.f32.mrb[0].mxu0
      %322 = vmatprep.mubr.f32.mxu0 0.0
      %323 = vmatmul.mubr.f32.gmra.mrb[0].mxu0 %v245
      %v324 = vpop.f32.mrb[0].mxu0
      %v325 = vadd.f32 0.0, %v324
      %v326 = vpop.f32.mrb[0].mxu0
      %327 = vmatprep.mubr.f32.mxu0 0.0
      %328 = vmatmul.mubr.f32.gmra.mrb[0].mxu0 %v248
      %v329 = vpop.f32.mrb[0].mxu0
      %v330 = vadd.f32 0.0, %v329
      %v331 = vpop.f32.mrb[0].mxu0
      %332 = vmatprep.mubr.f32.mxu0 0.0
      %333 = vmatmul.mubr.f32.gmra.mrb[0].mxu0 %v251
      %v334 = vpop.f32.mrb[0].mxu0
      %v335 = vadd.f32 0.0, %v334
      %v336 = vpop.f32.mrb[0].mxu0
      %337 = vdwg.mxu0
      %v338 = vadd.s32 %v141, 16
      %vm339 = vcmp.eq.s32.totalorder %v138, %v338
      %vm340 = vcmp.eq.s32.totalorder %v139, %v338
      %vm341 = vcmp.eq.s32.totalorder %v233, %v338
      %vm342 = vcmp.eq.s32.totalorder %v234, %v338
      %v343 = vsel %vm339, 1, 0
      %v344 = vsel %vm340, 1, 0
      %v345 = vsel %vm341, 1, 0
      %v346 = vsel %vm342, 1, 0
      %v347 = vcvt.s32.f32 %v343
      %v348 = vcvt.s32.f32 %v344
      %v349 = vcvt.s32.f32 %v345
      %v350 = vcvt.s32.f32 %v346
      %v352 = vsel %vm114, %v347, 0
      %v355 = vsel %vm114, %v348, 0
      %v358 = vsel %vm114, %v349, 0
      %v361 = vsel %vm114, %v350, 0
      %363 = vmatprep.subr.mxu0 0.0
      %364 = vmatpush1.msra.mxu0 %v134
      %365 = vmatprep.subr.mxu0 0.0
      %366 = vmatpush1.msra.mxu0 %v136
      %367 = vmatprep.subr.mxu0 0.0
      %368 = vmatpush1.msra.mxu0 0.0
      %369 = vmatprep.subr.mxu0 0.0
      %370 = vmatpush1.msra.mxu0 0.0
      %371 = vmatprep.subr.mxu0 0.0
      %372 = vmatpush1.msra.mxu0 0.0
      %373 = vmatprep.subr.mxu0 0.0
      %374 = vmatpush1.msra.mxu0 0.0
      %375 = vmatprep.subr.mxu0 0.0
      %376 = vmatpush1.msra.mxu0 0.0
      %377 = vmatprep.subr.mxu0 0.0
      %378 = vmatpush1.msra.mxu0 0.0
      %379 = vmatprep.subr.mxu0 0.0
      %380 = vmatpush1.msra.mxu0 0.0
      %381 = vmatprep.subr.mxu0 0.0
      %382 = vmatpush1.msra.mxu0 0.0
      %383 = vmatprep.subr.mxu0 0.0
      %384 = vmatpush1.msra.mxu0 0.0
      %385 = vmatprep.subr.mxu0 0.0
      %386 = vmatpush1.msra.mxu0 0.0
      %387 = vmatprep.subr.mxu0 0.0
      %388 = vmatpush1.msra.mxu0 0.0
      %389 = vmatprep.subr.mxu0 0.0
      %390 = vmatpush1.msra.mxu0 0.0
      %391 = vmatprep.subr.mxu0 0.0
      %392 = vmatpush1.msra.mxu0 0.0
      %393 = vmatprep.subr.mxu0 0.0
      %394 = vmatpush1.msra.mxu0 0.0
      %395 = vmatprep.subr.mxu0 0.0
      %396 = vmatpush1.msra.mxu0 0.0
      %397 = vmatprep.subr.mxu0 0.0
      %398 = vmatpush1.msra.mxu0 0.0
      %399 = vmatprep.subr.mxu0 0.0
      %400 = vmatpush1.msra.mxu0 0.0
      %401 = vmatprep.subr.mxu0 0.0
      %402 = vmatpush1.msra.mxu0 0.0
      %403 = vmatprep.subr.mxu0 0.0
      %404 = vmatpush1.msra.mxu0 0.0
      %405 = vmatprep.subr.mxu0 0.0
      %406 = vmatpush1.msra.mxu0 0.0
      %407 = vmatprep.subr.mxu0 0.0
      %408 = vmatpush1.msra.mxu0 0.0
      %409 = vmatprep.subr.mxu0 0.0
      %410 = vmatpush1.msra.mxu0 0.0
      %411 = vmatprep.subr.mxu0 0.0
      %412 = vmatpush1.msra.mxu0 0.0
      %413 = vmatprep.subr.mxu0 0.0
      %414 = vmatpush1.msra.mxu0 0.0
      %415 = vmatprep.subr.mxu0 0.0
      %416 = vmatpush1.msra.mxu0 0.0
      %417 = vmatprep.subr.mxu0 0.0
      %418 = vmatpush1.msra.mxu0 0.0
      %419 = vmatprep.subr.mxu0 0.0
      %420 = vmatpush1.msra.mxu0 0.0
      %421 = vmatprep.subr.mxu0 0.0
      %422 = vmatpush1.msra.mxu0 0.0
      %423 = vmatprep.subr.mxu0 0.0
      %424 = vmatpush1.msra.mxu0 0.0
      %425 = vmatprep.subr.mxu0 0.0
      %426 = vmatpush1.msra.mxu0 0.0
      %427 = vmatprep.mubr.f32.mxu0 0.0
      %428 = vmatmul.mubr.f32.gmra.mrb[0].mxu0 %v352
      %v429 = vpop.f32.mrb[0].mxu0
      %v430 = vadd.f32 0.0, %v429
      %v431 = vpop.f32.mrb[0].mxu0
      %432 = vmatprep.mubr.f32.mxu0 0.0
      %433 = vmatmul.mubr.f32.gmra.mrb[0].mxu0 %v355
      %v434 = vpop.f32.mrb[0].mxu0
      %v435 = vadd.f32 0.0, %v434
      %v436 = vpop.f32.mrb[0].mxu0
      %437 = vmatprep.mubr.f32.mxu0 0.0
      %438 = vmatmul.mubr.f32.gmra.mrb[0].mxu0 %v358
      %v439 = vpop.f32.mrb[0].mxu0
      %v440 = vadd.f32 0.0, %v439
      %v441 = vpop.f32.mrb[0].mxu0
      %442 = vmatprep.mubr.f32.mxu0 0.0
      %443 = vmatmul.mubr.f32.gmra.mrb[0].mxu0 %v361
      %v444 = vpop.f32.mrb[0].mxu0
      %v445 = vadd.f32 0.0, %v444
      %v446 = vpop.f32.mrb[0].mxu0
      %447 = vdwg.mxu0
      %v449 = vsel %vm114, %v430, 0
      %v452 = vsel %vm114, %v435, 0
      %v455 = vsel %vm114, %v440, 0
      %v458 = vsel %vm114, %v445, 0
      %460 = vmatprep.subr.mxu0 0.0
      %461 = vmatpush1.xpose.msra.mxu0 %v352
      %462 = vmatprep.subr.mxu0 0.0
      %463 = vmatpush1.xpose.msra.mxu0 %v355
      %464 = vmatprep.subr.mxu0 0.0
      %465 = vmatpush1.xpose.msra.mxu0 %v358
      %466 = vmatprep.subr.mxu0 0.0
      %467 = vmatpush1.xpose.msra.mxu0 %v361
      %468 = vmatprep.subr.mxu0 0.0
      %469 = vmatpush1.xpose.msra.mxu0 0.0
      %470 = vmatprep.subr.mxu0 0.0
      %471 = vmatpush1.xpose.msra.mxu0 0.0
      %472 = vmatprep.subr.mxu0 0.0
      %473 = vmatpush1.xpose.msra.mxu0 0.0
      %474 = vmatprep.subr.mxu0 0.0
      %475 = vmatpush1.xpose.msra.mxu0 0.0
      %476 = vmatprep.subr.mxu0 0.0
      %477 = vmatpush1.xpose.msra.mxu0 0.0
      %478 = vmatprep.subr.mxu0 0.0
      %479 = vmatpush1.xpose.msra.mxu0 0.0
      %480 = vmatprep.subr.mxu0 0.0
      %481 = vmatpush1.xpose.msra.mxu0 0.0
      %482 = vmatprep.subr.mxu0 0.0
      %483 = vmatpush1.xpose.msra.mxu0 0.0
      %484 = vmatprep.subr.mxu0 0.0
      %485 = vmatpush1.xpose.msra.mxu0 0.0
      %486 = vmatprep.subr.mxu0 0.0
      %487 = vmatpush1.xpose.msra.mxu0 0.0
      %488 = vmatprep.subr.mxu0 0.0
      %489 = vmatpush1.xpose.msra.mxu0 0.0
      %490 = vmatprep.subr.mxu0 0.0
      %491 = vmatpush1.xpose.msra.mxu0 0.0
      %492 = vmatprep.subr.mxu0 0.0
      %493 = vmatpush1.xpose.msra.mxu0 0.0
      %494 = vmatprep.subr.mxu0 0.0
      %495 = vmatpush1.xpose.msra.mxu0 0.0
      %496 = vmatprep.subr.mxu0 0.0
      %497 = vmatpush1.xpose.msra.mxu0 0.0
      %498 = vmatprep.subr.mxu0 0.0
      %499 = vmatpush1.xpose.msra.mxu0 0.0
      %500 = vmatprep.subr.mxu0 0.0
      %501 = vmatpush1.xpose.msra.mxu0 0.0
      %502 = vmatprep.subr.mxu0 0.0
      %503 = vmatpush1.xpose.msra.mxu0 0.0
      %504 = vmatprep.subr.mxu0 0.0
      %505 = vmatpush1.xpose.msra.mxu0 0.0
      %506 = vmatprep.subr.mxu0 0.0
      %507 = vmatpush1.xpose.msra.mxu0 0.0
      %508 = vmatprep.subr.mxu0 0.0
      %509 = vmatpush1.xpose.msra.mxu0 0.0
      %510 = vmatprep.subr.mxu0 0.0
      %511 = vmatpush1.xpose.msra.mxu0 0.0
      %512 = vmatprep.subr.mxu0 0.0
      %513 = vmatpush1.xpose.msra.mxu0 0.0
      %514 = vmatprep.subr.mxu0 0.0
      %515 = vmatpush1.xpose.msra.mxu0 0.0
      %516 = vmatprep.subr.mxu0 0.0
      %517 = vmatpush1.xpose.msra.mxu0 0.0
      %518 = vmatprep.subr.mxu0 0.0
      %519 = vmatpush1.xpose.msra.mxu0 0.0
      %520 = vmatprep.subr.mxu0 0.0
      %521 = vmatpush1.xpose.msra.mxu0 0.0
      %522 = vmatprep.subr.mxu0 0.0
      %523 = vmatpush1.xpose.msra.mxu0 0.0
      %524 = vmatprep.mubr.f32.mxu0 0.0
      %525 = vmatmul.mubr.f32.gmra.mrb[0].mxu0 %v449
      %v526 = vpop.f32.mrb[0].mxu0
      %v527 = vadd.f32 0.0, %v526
      %v528 = vpop.f32.mrb[0].mxu0
      %529 = vmatprep.mubr.f32.mxu0 0.0
      %530 = vmatmul.mubr.f32.gmra.mrb[0].mxu0 %v452
      %v531 = vpop.f32.mrb[0].mxu0
      %v532 = vadd.f32 0.0, %v531
      %v533 = vpop.f32.mrb[0].mxu0
      %534 = vmatprep.mubr.f32.mxu0 0.0
      %535 = vmatmul.mubr.f32.gmra.mrb[0].mxu0 %v455
      %v536 = vpop.f32.mrb[0].mxu0
      %v537 = vadd.f32 0.0, %v536
      %v538 = vpop.f32.mrb[0].mxu0
      %539 = vmatprep.mubr.f32.mxu0 0.0
      %540 = vmatmul.mubr.f32.gmra.mrb[0].mxu0 %v458
      %v541 = vpop.f32.mrb[0].mxu0
      %v542 = vadd.f32 0.0, %v541
      %v543 = vpop.f32.mrb[0].mxu0
      %544 = vdwg.mxu0
      %v546 = vsel %vm114, %v320, 0
      %v549 = vsel %vm114, %v325, 0
      %v552 = vsel %vm114, %v330, 0
      %v555 = vsel %vm114, %v335, 0
      %557 = vmatprep.subr.mxu0 0.0
      %558 = vmatpush1.xpose.msra.mxu0 %v242
      %559 = vmatprep.subr.mxu0 0.0
      %560 = vmatpush1.xpose.msra.mxu0 %v245
      %561 = vmatprep.subr.mxu0 0.0
      %562 = vmatpush1.xpose.msra.mxu0 %v248
      %563 = vmatprep.subr.mxu0 0.0
      %564 = vmatpush1.xpose.msra.mxu0 %v251
      %565 = vmatprep.subr.mxu0 0.0
      %566 = vmatpush1.xpose.msra.mxu0 0.0
      %567 = vmatprep.subr.mxu0 0.0
      %568 = vmatpush1.xpose.msra.mxu0 0.0
      %569 = vmatprep.subr.mxu0 0.0
      %570 = vmatpush1.xpose.msra.mxu0 0.0
      %571 = vmatprep.subr.mxu0 0.0
      %572 = vmatpush1.xpose.msra.mxu0 0.0
      %573 = vmatprep.subr.mxu0 0.0
      %574 = vmatpush1.xpose.msra.mxu0 0.0
      %575 = vmatprep.subr.mxu0 0.0
      %576 = vmatpush1.xpose.msra.mxu0 0.0
      %577 = vmatprep.subr.mxu0 0.0
      %578 = vmatpush1.xpose.msra.mxu0 0.0
      %579 = vmatprep.subr.mxu0 0.0
      %580 = vmatpush1.xpose.msra.mxu0 0.0
      %581 = vmatprep.subr.mxu0 0.0
      %582 = vmatpush1.xpose.msra.mxu0 0.0
      %583 = vmatprep.subr.mxu0 0.0
      %584 = vmatpush1.xpose.msra.mxu0 0.0
      %585 = vmatprep.subr.mxu0 0.0
      %586 = vmatpush1.xpose.msra.mxu0 0.0
      %587 = vmatprep.subr.mxu0 0.0
      %588 = vmatpush1.xpose.msra.mxu0 0.0
      %589 = vmatprep.subr.mxu0 0.0
      %590 = vmatpush1.xpose.msra.mxu0 0.0
      %591 = vmatprep.subr.mxu0 0.0
      %592 = vmatpush1.xpose.msra.mxu0 0.0
      %593 = vmatprep.subr.mxu0 0.0
      %594 = vmatpush1.xpose.msra.mxu0 0.0
      %595 = vmatprep.subr.mxu0 0.0
      %596 = vmatpush1.xpose.msra.mxu0 0.0
      %597 = vmatprep.subr.mxu0 0.0
      %598 = vmatpush1.xpose.msra.mxu0 0.0
      %599 = vmatprep.subr.mxu0 0.0
      %600 = vmatpush1.xpose.msra.mxu0 0.0
      %601 = vmatprep.subr.mxu0 0.0
      %602 = vmatpush1.xpose.msra.mxu0 0.0
      %603 = vmatprep.subr.mxu0 0.0
      %604 = vmatpush1.xpose.msra.mxu0 0.0
      %605 = vmatprep.subr.mxu0 0.0
      %606 = vmatpush1.xpose.msra.mxu0 0.0
      %607 = vmatprep.subr.mxu0 0.0
      %608 = vmatpush1.xpose.msra.mxu0 0.0
      %609 = vmatprep.subr.mxu0 0.0
      %610 = vmatpush1.xpose.msra.mxu0 0.0
      %611 = vmatprep.subr.mxu0 0.0
      %612 = vmatpush1.xpose.msra.mxu0 0.0
      %613 = vmatprep.subr.mxu0 0.0
      %614 = vmatpush1.xpose.msra.mxu0 0.0
      %615 = vmatprep.subr.mxu0 0.0
      %616 = vmatpush1.xpose.msra.mxu0 0.0
      %617 = vmatprep.subr.mxu0 0.0
      %618 = vmatpush1.xpose.msra.mxu0 0.0
      %619 = vmatprep.subr.mxu0 0.0
      %620 = vmatpush1.xpose.msra.mxu0 0.0
      %621 = vmatprep.mubr.f32.mxu0 0.0
      %622 = vmatmul.mubr.f32.gmra.mrb[0].mxu0 %v546
      %v623 = vpop.f32.mrb[0].mxu0
      %v624 = vadd.f32 %v527, %v623
      %v625 = vpop.f32.mrb[0].mxu0
      %626 = vmatprep.mubr.f32.mxu0 0.0
      %627 = vmatmul.mubr.f32.gmra.mrb[0].mxu0 %v549
      %v628 = vpop.f32.mrb[0].mxu0
      %v629 = vadd.f32 %v532, %v628
      %v630 = vpop.f32.mrb[0].mxu0
      %631 = vmatprep.mubr.f32.mxu0 0.0
      %632 = vmatmul.mubr.f32.gmra.mrb[0].mxu0 %v552
      %v633 = vpop.f32.mrb[0].mxu0
      %v634 = vadd.f32 %v537, %v633
      %v635 = vpop.f32.mrb[0].mxu0
      %636 = vmatprep.mubr.f32.mxu0 0.0
      %637 = vmatmul.mubr.f32.gmra.mrb[0].mxu0 %v555
      %v638 = vpop.f32.mrb[0].mxu0
      %v639 = vadd.f32 %v542, %v638
      %v640 = vpop.f32.mrb[0].mxu0
      %641 = vdwg.mxu0
      %vm642 = vcmask 261120
      %643 = vst.msk [vmem:[#allocation2] sm:$0xff] %vm642, %v624
      %644 = vst.msk [vmem:[#allocation2 + $0x8] sm:$0xff] %vm642, %v629
      %645 = vst.msk [vmem:[#allocation2 + $0x10] sm:$0xff] %vm642, %v634
      %646 = vst.msk [vmem:[#allocation2 + $0x18] sm:$0xff] %vm642, %v639
      %647 = vmatprep.subr.mxu0 0.0
      %648 = vmatpush1.msra.mxu0 %v231
      %649 = vmatprep.subr.mxu0 0.0
      %650 = vmatpush1.msra.mxu0 %v232
      %651 = vmatprep.subr.mxu0 0.0
      %652 = vmatpush1.msra.mxu0 0.0
      %653 = vmatprep.subr.mxu0 0.0
      %654 = vmatpush1.msra.mxu0 0.0
      %655 = vmatprep.subr.mxu0 0.0
      %656 = vmatpush1.msra.mxu0 0.0
      %657 = vmatprep.subr.mxu0 0.0
      %658 = vmatpush1.msra.mxu0 0.0
      %659 = vmatprep.subr.mxu0 0.0
      %660 = vmatpush1.msra.mxu0 0.0
      %661 = vmatprep.subr.mxu0 0.0
      %662 = vmatpush1.msra.mxu0 0.0
      %663 = vmatprep.subr.mxu0 0.0
      %664 = vmatpush1.msra.mxu0 0.0
      %665 = vmatprep.subr.mxu0 0.0
      %666 = vmatpush1.msra.mxu0 0.0
      %667 = vmatprep.subr.mxu0 0.0
      %668 = vmatpush1.msra.mxu0 0.0
      %669 = vmatprep.subr.mxu0 0.0
      %670 = vmatpush1.msra.mxu0 0.0
      %671 = vmatprep.subr.mxu0 0.0
      %672 = vmatpush1.msra.mxu0 0.0
      %673 = vmatprep.subr.mxu0 0.0
      %674 = vmatpush1.msra.mxu0 0.0
      %675 = vmatprep.subr.mxu0 0.0
      %676 = vmatpush1.msra.mxu0 0.0
      %677 = vmatprep.subr.mxu0 0.0
      %678 = vmatpush1.msra.mxu0 0.0
      %679 = vmatprep.subr.mxu0 0.0
      %680 = vmatpush1.msra.mxu0 0.0
      %681 = vmatprep.subr.mxu0 0.0
      %682 = vmatpush1.msra.mxu0 0.0
      %683 = vmatprep.subr.mxu0 0.0
      %684 = vmatpush1.msra.mxu0 0.0
      %685 = vmatprep.subr.mxu0 0.0
      %686 = vmatpush1.msra.mxu0 0.0
      %687 = vmatprep.subr.mxu0 0.0
      %688 = vmatpush1.msra.mxu0 0.0
      %689 = vmatprep.subr.mxu0 0.0
      %690 = vmatpush1.msra.mxu0 0.0
      %691 = vmatprep.subr.mxu0 0.0
      %692 = vmatpush1.msra.mxu0 0.0
      %693 = vmatprep.subr.mxu0 0.0
      %694 = vmatpush1.msra.mxu0 0.0
      %695 = vmatprep.subr.mxu0 0.0
      %696 = vmatpush1.msra.mxu0 0.0
      %697 = vmatprep.subr.mxu0 0.0
      %698 = vmatpush1.msra.mxu0 0.0
      %699 = vmatprep.subr.mxu0 0.0
      %700 = vmatpush1.msra.mxu0 0.0
      %701 = vmatprep.subr.mxu0 0.0
      %702 = vmatpush1.msra.mxu0 0.0
      %703 = vmatprep.subr.mxu0 0.0
      %704 = vmatpush1.msra.mxu0 0.0
      %705 = vmatprep.subr.mxu0 0.0
      %706 = vmatpush1.msra.mxu0 0.0
      %707 = vmatprep.subr.mxu0 0.0
      %708 = vmatpush1.msra.mxu0 0.0
      %709 = vmatprep.subr.mxu0 0.0
      %710 = vmatpush1.msra.mxu0 0.0
      %711 = vmatprep.mubr.f32.mxu0 0.0
      %712 = vmatmul.mubr.f32.gmra.mrb[0].mxu0 %v242
      %v713 = vpop.f32.mrb[0].mxu0
      %v714 = vadd.f32 0.0, %v713
      %v715 = vpop.f32.mrb[0].mxu0
      %716 = vmatprep.mubr.f32.mxu0 0.0
      %717 = vmatmul.mubr.f32.gmra.mrb[0].mxu0 %v245
      %v718 = vpop.f32.mrb[0].mxu0
      %v719 = vadd.f32 0.0, %v718
      %v720 = vpop.f32.mrb[0].mxu0
      %721 = vmatprep.mubr.f32.mxu0 0.0
      %722 = vmatmul.mubr.f32.gmra.mrb[0].mxu0 %v248
      %v723 = vpop.f32.mrb[0].mxu0
      %v724 = vadd.f32 0.0, %v723
      %v725 = vpop.f32.mrb[0].mxu0
      %726 = vmatprep.mubr.f32.mxu0 0.0
      %727 = vmatmul.mubr.f32.gmra.mrb[0].mxu0 %v251
      %v728 = vpop.f32.mrb[0].mxu0
      %v729 = vadd.f32 0.0, %v728
      %v730 = vpop.f32.mrb[0].mxu0
      %731 = vdwg.mxu0
      %732 = vmatprep.subr.mxu0 0.0
      %733 = vmatpush1.msra.mxu0 %v231
      %734 = vmatprep.subr.mxu0 0.0
      %735 = vmatpush1.msra.mxu0 %v232
      %736 = vmatprep.subr.mxu0 0.0
      %737 = vmatpush1.msra.mxu0 0.0
      %738 = vmatprep.subr.mxu0 0.0
      %739 = vmatpush1.msra.mxu0 0.0
      %740 = vmatprep.subr.mxu0 0.0
      %741 = vmatpush1.msra.mxu0 0.0
      %742 = vmatprep.subr.mxu0 0.0
      %743 = vmatpush1.msra.mxu0 0.0
      %744 = vmatprep.subr.mxu0 0.0
      %745 = vmatpush1.msra.mxu0 0.0
      %746 = vmatprep.subr.mxu0 0.0
      %747 = vmatpush1.msra.mxu0 0.0
      %748 = vmatprep.subr.mxu0 0.0
      %749 = vmatpush1.msra.mxu0 0.0
      %750 = vmatprep.subr.mxu0 0.0
      %751 = vmatpush1.msra.mxu0 0.0
      %752 = vmatprep.subr.mxu0 0.0
      %753 = vmatpush1.msra.mxu0 0.0
      %754 = vmatprep.subr.mxu0 0.0
      %755 = vmatpush1.msra.mxu0 0.0
      %756 = vmatprep.subr.mxu0 0.0
      %757 = vmatpush1.msra.mxu0 0.0
      %758 = vmatprep.subr.mxu0 0.0
      %759 = vmatpush1.msra.mxu0 0.0
      %760 = vmatprep.subr.mxu0 0.0
      %761 = vmatpush1.msra.mxu0 0.0
      %762 = vmatprep.subr.mxu0 0.0
      %763 = vmatpush1.msra.mxu0 0.0
      %764 = vmatprep.subr.mxu0 0.0
      %765 = vmatpush1.msra.mxu0 0.0
      %766 = vmatprep.subr.mxu0 0.0
      %767 = vmatpush1.msra.mxu0 0.0
      %768 = vmatprep.subr.mxu0 0.0
      %769 = vmatpush1.msra.mxu0 0.0
      %770 = vmatprep.subr.mxu0 0.0
      %771 = vmatpush1.msra.mxu0 0.0
      %772 = vmatprep.subr.mxu0 0.0
      %773 = vmatpush1.msra.mxu0 0.0
      %774 = vmatprep.subr.mxu0 0.0
      %775 = vmatpush1.msra.mxu0 0.0
      %776 = vmatprep.subr.mxu0 0.0
      %777 = vmatpush1.msra.mxu0 0.0
      %778 = vmatprep.subr.mxu0 0.0
      %779 = vmatpush1.msra.mxu0 0.0
      %780 = vmatprep.subr.mxu0 0.0
      %781 = vmatpush1.msra.mxu0 0.0
      %782 = vmatprep.subr.mxu0 0.0
      %783 = vmatpush1.msra.mxu0 0.0
      %784 = vmatprep.subr.mxu0 0.0
      %785 = vmatpush1.msra.mxu0 0.0
      %786 = vmatprep.subr.mxu0 0.0
      %787 = vmatpush1.msra.mxu0 0.0
      %788 = vmatprep.subr.mxu0 0.0
      %789 = vmatpush1.msra.mxu0 0.0
      %790 = vmatprep.subr.mxu0 0.0
      %791 = vmatpush1.msra.mxu0 0.0
      %792 = vmatprep.subr.mxu0 0.0
      %793 = vmatpush1.msra.mxu0 0.0
      %794 = vmatprep.subr.mxu0 0.0
      %795 = vmatpush1.msra.mxu0 0.0
      %796 = vmatprep.mubr.f32.mxu0 0.0
      %797 = vmatmul.mubr.f32.gmra.mrb[0].mxu0 %v352
      %v798 = vpop.f32.mrb[0].mxu0
      %v799 = vadd.f32 0.0, %v798
      %v800 = vpop.f32.mrb[0].mxu0
      %801 = vmatprep.mubr.f32.mxu0 0.0
      %802 = vmatmul.mubr.f32.gmra.mrb[0].mxu0 %v355
      %v803 = vpop.f32.mrb[0].mxu0
      %v804 = vadd.f32 0.0, %v803
      %v805 = vpop.f32.mrb[0].mxu0
      %806 = vmatprep.mubr.f32.mxu0 0.0
      %807 = vmatmul.mubr.f32.gmra.mrb[0].mxu0 %v358
      %v808 = vpop.f32.mrb[0].mxu0
      %v809 = vadd.f32 0.0, %v808
      %v810 = vpop.f32.mrb[0].mxu0
      %811 = vmatprep.mubr.f32.mxu0 0.0
      %812 = vmatmul.mubr.f32.gmra.mrb[0].mxu0 %v361
      %v813 = vpop.f32.mrb[0].mxu0
      %v814 = vadd.f32 0.0, %v813
      %v815 = vpop.f32.mrb[0].mxu0
      %816 = vdwg.mxu0
      %v818 = vsel %vm114, %v799, 0
      %v821 = vsel %vm114, %v804, 0
      %v824 = vsel %vm114, %v809, 0
      %v827 = vsel %vm114, %v814, 0
      %829 = vmatprep.subr.mxu0 0.0
      %830 = vmatpush1.xpose.msra.mxu0 %v352
      %831 = vmatprep.subr.mxu0 0.0
      %832 = vmatpush1.xpose.msra.mxu0 %v355
      %833 = vmatprep.subr.mxu0 0.0
      %834 = vmatpush1.xpose.msra.mxu0 %v358
      %835 = vmatprep.subr.mxu0 0.0
      %836 = vmatpush1.xpose.msra.mxu0 %v361
      %837 = vmatprep.subr.mxu0 0.0
      %838 = vmatpush1.xpose.msra.mxu0 0.0
      %839 = vmatprep.subr.mxu0 0.0
      %840 = vmatpush1.xpose.msra.mxu0 0.0
      %841 = vmatprep.subr.mxu0 0.0
      %842 = vmatpush1.xpose.msra.mxu0 0.0
      %843 = vmatprep.subr.mxu0 0.0
      %844 = vmatpush1.xpose.msra.mxu0 0.0
      %845 = vmatprep.subr.mxu0 0.0
      %846 = vmatpush1.xpose.msra.mxu0 0.0
      %847 = vmatprep.subr.mxu0 0.0
      %848 = vmatpush1.xpose.msra.mxu0 0.0
      %849 = vmatprep.subr.mxu0 0.0
      %850 = vmatpush1.xpose.msra.mxu0 0.0
      %851 = vmatprep.subr.mxu0 0.0
      %852 = vmatpush1.xpose.msra.mxu0 0.0
      %853 = vmatprep.subr.mxu0 0.0
      %854 = vmatpush1.xpose.msra.mxu0 0.0
      %855 = vmatprep.subr.mxu0 0.0
      %856 = vmatpush1.xpose.msra.mxu0 0.0
      %857 = vmatprep.subr.mxu0 0.0
      %858 = vmatpush1.xpose.msra.mxu0 0.0
      %859 = vmatprep.subr.mxu0 0.0
      %860 = vmatpush1.xpose.msra.mxu0 0.0
      %861 = vmatprep.subr.mxu0 0.0
      %862 = vmatpush1.xpose.msra.mxu0 0.0
      %863 = vmatprep.subr.mxu0 0.0
      %864 = vmatpush1.xpose.msra.mxu0 0.0
      %865 = vmatprep.subr.mxu0 0.0
      %866 = vmatpush1.xpose.msra.mxu0 0.0
      %867 = vmatprep.subr.mxu0 0.0
      %868 = vmatpush1.xpose.msra.mxu0 0.0
      %869 = vmatprep.subr.mxu0 0.0
      %870 = vmatpush1.xpose.msra.mxu0 0.0
      %871 = vmatprep.subr.mxu0 0.0
      %872 = vmatpush1.xpose.msra.mxu0 0.0
      %873 = vmatprep.subr.mxu0 0.0
      %874 = vmatpush1.xpose.msra.mxu0 0.0
      %875 = vmatprep.subr.mxu0 0.0
      %876 = vmatpush1.xpose.msra.mxu0 0.0
      %877 = vmatprep.subr.mxu0 0.0
      %878 = vmatpush1.xpose.msra.mxu0 0.0
      %879 = vmatprep.subr.mxu0 0.0
      %880 = vmatpush1.xpose.msra.mxu0 0.0
      %881 = vmatprep.subr.mxu0 0.0
      %882 = vmatpush1.xpose.msra.mxu0 0.0
      %883 = vmatprep.subr.mxu0 0.0
      %884 = vmatpush1.xpose.msra.mxu0 0.0
      %885 = vmatprep.subr.mxu0 0.0
      %886 = vmatpush1.xpose.msra.mxu0 0.0
      %887 = vmatprep.subr.mxu0 0.0
      %888 = vmatpush1.xpose.msra.mxu0 0.0
      %889 = vmatprep.subr.mxu0 0.0
      %890 = vmatpush1.xpose.msra.mxu0 0.0
      %891 = vmatprep.subr.mxu0 0.0
      %892 = vmatpush1.xpose.msra.mxu0 0.0
      %893 = vmatprep.mubr.f32.mxu0 0.0
      %894 = vmatmul.mubr.f32.gmra.mrb[0].mxu0 %v818
      %v895 = vpop.f32.mrb[0].mxu0
      %v896 = vadd.f32 0.0, %v895
      %v897 = vpop.f32.mrb[0].mxu0
      %898 = vmatprep.mubr.f32.mxu0 0.0
      %899 = vmatmul.mubr.f32.gmra.mrb[0].mxu0 %v821
      %v900 = vpop.f32.mrb[0].mxu0
      %v901 = vadd.f32 0.0, %v900
      %v902 = vpop.f32.mrb[0].mxu0
      %903 = vmatprep.mubr.f32.mxu0 0.0
      %904 = vmatmul.mubr.f32.gmra.mrb[0].mxu0 %v824
      %v905 = vpop.f32.mrb[0].mxu0
      %v906 = vadd.f32 0.0, %v905
      %v907 = vpop.f32.mrb[0].mxu0
      %908 = vmatprep.mubr.f32.mxu0 0.0
      %909 = vmatmul.mubr.f32.gmra.mrb[0].mxu0 %v827
      %v910 = vpop.f32.mrb[0].mxu0
      %v911 = vadd.f32 0.0, %v910
      %v912 = vpop.f32.mrb[0].mxu0
      %913 = vdwg.mxu0
      %v915 = vsel %vm114, %v714, 0
      %v918 = vsel %vm114, %v719, 0
      %v921 = vsel %vm114, %v724, 0
      %v924 = vsel %vm114, %v729, 0
      %926 = vmatprep.subr.mxu0 0.0
      %927 = vmatpush1.xpose.msra.mxu0 %v242
      %928 = vmatprep.subr.mxu0 0.0
      %929 = vmatpush1.xpose.msra.mxu0 %v245
      %930 = vmatprep.subr.mxu0 0.0
      %931 = vmatpush1.xpose.msra.mxu0 %v248
      %932 = vmatprep.subr.mxu0 0.0
      %933 = vmatpush1.xpose.msra.mxu0 %v251
      %934 = vmatprep.subr.mxu0 0.0
      %935 = vmatpush1.xpose.msra.mxu0 0.0
      %936 = vmatprep.subr.mxu0 0.0
      %937 = vmatpush1.xpose.msra.mxu0 0.0
      %938 = vmatprep.subr.mxu0 0.0
      %939 = vmatpush1.xpose.msra.mxu0 0.0
      %940 = vmatprep.subr.mxu0 0.0
      %941 = vmatpush1.xpose.msra.mxu0 0.0
      %942 = vmatprep.subr.mxu0 0.0
      %943 = vmatpush1.xpose.msra.mxu0 0.0
      %944 = vmatprep.subr.mxu0 0.0
      %945 = vmatpush1.xpose.msra.mxu0 0.0
      %946 = vmatprep.subr.mxu0 0.0
      %947 = vmatpush1.xpose.msra.mxu0 0.0
      %948 = vmatprep.subr.mxu0 0.0
      %949 = vmatpush1.xpose.msra.mxu0 0.0
      %950 = vmatprep.subr.mxu0 0.0
      %951 = vmatpush1.xpose.msra.mxu0 0.0
      %952 = vmatprep.subr.mxu0 0.0
      %953 = vmatpush1.xpose.msra.mxu0 0.0
      %954 = vmatprep.subr.mxu0 0.0
      %955 = vmatpush1.xpose.msra.mxu0 0.0
      %956 = vmatprep.subr.mxu0 0.0
      %957 = vmatpush1.xpose.msra.mxu0 0.0
      %958 = vmatprep.subr.mxu0 0.0
      %959 = vmatpush1.xpose.msra.mxu0 0.0
      %960 = vmatprep.subr.mxu0 0.0
      %961 = vmatpush1.xpose.msra.mxu0 0.0
      %962 = vmatprep.subr.mxu0 0.0
      %963 = vmatpush1.xpose.msra.mxu0 0.0
      %964 = vmatprep.subr.mxu0 0.0
      %965 = vmatpush1.xpose.msra.mxu0 0.0
      %966 = vmatprep.subr.mxu0 0.0
      %967 = vmatpush1.xpose.msra.mxu0 0.0
      %968 = vmatprep.subr.mxu0 0.0
      %969 = vmatpush1.xpose.msra.mxu0 0.0
      %970 = vmatprep.subr.mxu0 0.0
      %971 = vmatpush1.xpose.msra.mxu0 0.0
      %972 = vmatprep.subr.mxu0 0.0
      %973 = vmatpush1.xpose.msra.mxu0 0.0
      %974 = vmatprep.subr.mxu0 0.0
      %975 = vmatpush1.xpose.msra.mxu0 0.0
      %976 = vmatprep.subr.mxu0 0.0
      %977 = vmatpush1.xpose.msra.mxu0 0.0
      %978 = vmatprep.subr.mxu0 0.0
      %979 = vmatpush1.xpose.msra.mxu0 0.0
      %980 = vmatprep.subr.mxu0 0.0
      %981 = vmatpush1.xpose.msra.mxu0 0.0
      %982 = vmatprep.subr.mxu0 0.0
      %983 = vmatpush1.xpose.msra.mxu0 0.0
      %984 = vmatprep.subr.mxu0 0.0
      %985 = vmatpush1.xpose.msra.mxu0 0.0
      %986 = vmatprep.subr.mxu0 0.0
      %987 = vmatpush1.xpose.msra.mxu0 0.0
      %988 = vmatprep.subr.mxu0 0.0
      %989 = vmatpush1.xpose.msra.mxu0 0.0
      %990 = vmatprep.mubr.f32.mxu0 0.0
      %991 = vmatmul.mubr.f32.gmra.mrb[0].mxu0 %v915
      %v992 = vpop.f32.mrb[0].mxu0
      %v993 = vadd.f32 %v896, %v992
      %v994 = vpop.f32.mrb[0].mxu0
      %995 = vmatprep.mubr.f32.mxu0 0.0
      %996 = vmatmul.mubr.f32.gmra.mrb[0].mxu0 %v918
      %v997 = vpop.f32.mrb[0].mxu0
      %v998 = vadd.f32 %v901, %v997
      %v999 = vpop.f32.mrb[0].mxu0
      %1000 = vmatprep.mubr.f32.mxu0 0.0
      %1001 = vmatmul.mubr.f32.gmra.mrb[0].mxu0 %v921
      %v1002 = vpop.f32.mrb[0].mxu0
      %v1003 = vadd.f32 %v906, %v1002
      %v1004 = vpop.f32.mrb[0].mxu0
      %1005 = vmatprep.mubr.f32.mxu0 0.0
      %1006 = vmatmul.mubr.f32.gmra.mrb[0].mxu0 %v924
      %v1007 = vpop.f32.mrb[0].mxu0
      %v1008 = vadd.f32 %v911, %v1007
      %v1009 = vpop.f32.mrb[0].mxu0
      %1010 = vdwg.mxu0
      %s1011 = scalar_lea.vmem [#allocation2], 32
      %1012 = vst.msk [vmem:[%s1011] sm:$0xff] %vm642, %v993
      %1013 = vst.msk [vmem:[%s1011 + $0x8] sm:$0xff] %vm642, %v998
      %1014 = vst.msk [vmem:[%s1011 + $0x10] sm:$0xff] %vm642, %v1003
      %1015 = vst.msk [vmem:[%s1011 + $0x18] sm:$0xff] %vm642, %v1008
      %v1016 = vld [vmem:[%s2] sm:$0xff]
      %v1017 = vld [vmem:[%s2 + $0x8] sm:$0xff]
      %v1018 = vld [vmem:[%s2 + $0x10] sm:$0xff]
      %v1019 = vld [vmem:[%s2 + $0x18] sm:$0xff]
      %1020 = vst.msk [vmem:[#allocation3] sm:$0xff] %vm642, %v1016
      %1021 = vst.msk [vmem:[#allocation3 + $0x8] sm:$0xff] %vm642, %v1017
      %1022 = vst.msk [vmem:[#allocation3 + $0x10] sm:$0xff] %vm642, %v1018
      %1023 = vst.msk [vmem:[#allocation3 + $0x18] sm:$0xff] %vm642, %v1019
    $region29: #{agcrn_cell_seq.1} parent=1 // pred_fallthru
      _
    %v1024 = vld [vmem:[%s1] sm:$0xff]
    %v1025 = vld [vmem:[%s1 + $0x8] sm:$0xff]
    %v1026 = vld [vmem:[%s1 + $0x10] sm:$0xff]
    %v1027 = vld [vmem:[%s1 + $0x18] sm:$0xff]
    %v1028 = vld [vmem:[#allocation3] sm:$0xff]
    %v1029 = vld [vmem:[#allocation3 + $0x8] sm:$0xff]
    %v1030 = vld [vmem:[#allocation3 + $0x10] sm:$0xff]
    %v1031 = vld [vmem:[#allocation3 + $0x18] sm:$0xff]
    %v1032 = vld [vmem:[%s5] sm:$0x3]
    %v1033 = vld [vmem:[%s3] sm:$0xf]
    %vm1034 = vcmask 31744
    %v1036 = vsel %vm1034, %v1024, 0
    %v1039 = vsel %vm1034, %v1025, 0
    %v1042 = vsel %vm1034, %v1026, 0
    %v1045 = vsel %vm1034, %v1027, 0
    %vm1047 = vcmask 1043456
    %v1049 = vsel %vm1047, %v1033, 0
    %1051 = vmatprep.subr.mxu0 0.0
    %1052 = vmatpush1.msra.mxu0 %v1049
    %1053 = vmatprep.subr.mxu0 0.0
    %1054 = vmatpush1.msra.mxu0 0.0
    %1055 = vmatprep.subr.mxu0 0.0
    %1056 = vmatpush1.msra.mxu0 0.0
    %1057 = vmatprep.subr.mxu0 0.0
    %1058 = vmatpush1.msra.mxu0 0.0
    %1059 = vmatprep.subr.mxu0 0.0
    %1060 = vmatpush1.msra.mxu0 0.0
    %1061 = vmatprep.subr.mxu0 0.0
    %1062 = vmatpush1.msra.mxu0 0.0
    %1063 = vmatprep.subr.mxu0 0.0
    %1064 = vmatpush1.msra.mxu0 0.0
    %1065 = vmatprep.subr.mxu0 0.0
    %1066 = vmatpush1.msra.mxu0 0.0
    %1067 = vmatprep.subr.mxu0 0.0
    %1068 = vmatpush1.msra.mxu0 0.0
    %1069 = vmatprep.subr.mxu0 0.0
    %1070 = vmatpush1.msra.mxu0 0.0
    %1071 = vmatprep.subr.mxu0 0.0
    %1072 = vmatpush1.msra.mxu0 0.0
    %1073 = vmatprep.subr.mxu0 0.0
    %1074 = vmatpush1.msra.mxu0 0.0
    %1075 = vmatprep.subr.mxu0 0.0
    %1076 = vmatpush1.msra.mxu0 0.0
    %1077 = vmatprep.subr.mxu0 0.0
    %1078 = vmatpush1.msra.mxu0 0.0
    %1079 = vmatprep.subr.mxu0 0.0
    %1080 = vmatpush1.msra.mxu0 0.0
    %1081 = vmatprep.subr.mxu0 0.0
    %1082 = vmatpush1.msra.mxu0 0.0
    %1083 = vmatprep.subr.mxu0 0.0
    %1084 = vmatpush1.msra.mxu0 0.0
    %1085 = vmatprep.subr.mxu0 0.0
    %1086 = vmatpush1.msra.mxu0 0.0
    %1087 = vmatprep.subr.mxu0 0.0
    %1088 = vmatpush1.msra.mxu0 0.0
    %1089 = vmatprep.subr.mxu0 0.0
    %1090 = vmatpush1.msra.mxu0 0.0
    %1091 = vmatprep.subr.mxu0 0.0
    %1092 = vmatpush1.msra.mxu0 0.0
    %1093 = vmatprep.subr.mxu0 0.0
    %1094 = vmatpush1.msra.mxu0 0.0
    %1095 = vmatprep.subr.mxu0 0.0
    %1096 = vmatpush1.msra.mxu0 0.0
    %1097 = vmatprep.subr.mxu0 0.0
    %1098 = vmatpush1.msra.mxu0 0.0
    %1099 = vmatprep.subr.mxu0 0.0
    %1100 = vmatpush1.msra.mxu0 0.0
    %1101 = vmatprep.subr.mxu0 0.0
    %1102 = vmatpush1.msra.mxu0 0.0
    %1103 = vmatprep.subr.mxu0 0.0
    %1104 = vmatpush1.msra.mxu0 0.0
    %1105 = vmatprep.subr.mxu0 0.0
    %1106 = vmatpush1.msra.mxu0 0.0
    %1107 = vmatprep.subr.mxu0 0.0
    %1108 = vmatpush1.msra.mxu0 0.0
    %1109 = vmatprep.subr.mxu0 0.0
    %1110 = vmatpush1.msra.mxu0 0.0
    %1111 = vmatprep.subr.mxu0 0.0
    %1112 = vmatpush1.msra.mxu0 0.0
    %1113 = vmatprep.subr.mxu0 0.0
    %1114 = vmatpush1.msra.mxu0 0.0
    %1115 = vmatprep.mubr.f32.mxu0 0.0
    %1116 = vmatmul.mubr.f32.gmra.mrb[0].mxu0 %v1036
    %v1117 = vpop.f32.mrb[0].mxu0
    %v1118 = vadd.f32 0.0, %v1117
    %v1119 = vpop.f32.mrb[0].mxu0
    %1120 = vmatprep.mubr.f32.mxu0 0.0
    %1121 = vmatmul.mubr.f32.gmra.mrb[0].mxu0 %v1039
    %v1122 = vpop.f32.mrb[0].mxu0
    %v1123 = vadd.f32 0.0, %v1122
    %v1124 = vpop.f32.mrb[0].mxu0
    %1125 = vmatprep.mubr.f32.mxu0 0.0
    %1126 = vmatmul.mubr.f32.gmra.mrb[0].mxu0 %v1042
    %v1127 = vpop.f32.mrb[0].mxu0
    %v1128 = vadd.f32 0.0, %v1127
    %v1129 = vpop.f32.mrb[0].mxu0
    %1130 = vmatprep.mubr.f32.mxu0 0.0
    %1131 = vmatmul.mubr.f32.gmra.mrb[0].mxu0 %v1045
    %v1132 = vpop.f32.mrb[0].mxu0
    %v1133 = vadd.f32 0.0, %v1132
    %v1134 = vpop.f32.mrb[0].mxu0
    %1135 = vdwg.mxu0
    %s1136 = scalar_lea.vmem %s3, 4
    %v1137 = vld [vmem:[%s1136] sm:$0xf]
    %v1139 = vsel %vm1047, %v1137, 0
    %1141 = vmatprep.subr.mxu0 0.0
    %1142 = vmatpush1.msra.mxu0 %v1139
    %1143 = vmatprep.subr.mxu0 0.0
    %1144 = vmatpush1.msra.mxu0 0.0
    %1145 = vmatprep.subr.mxu0 0.0
    %1146 = vmatpush1.msra.mxu0 0.0
    %1147 = vmatprep.subr.mxu0 0.0
    %1148 = vmatpush1.msra.mxu0 0.0
    %1149 = vmatprep.subr.mxu0 0.0
    %1150 = vmatpush1.msra.mxu0 0.0
    %1151 = vmatprep.subr.mxu0 0.0
    %1152 = vmatpush1.msra.mxu0 0.0
    %1153 = vmatprep.subr.mxu0 0.0
    %1154 = vmatpush1.msra.mxu0 0.0
    %1155 = vmatprep.subr.mxu0 0.0
    %1156 = vmatpush1.msra.mxu0 0.0
    %1157 = vmatprep.subr.mxu0 0.0
    %1158 = vmatpush1.msra.mxu0 0.0
    %1159 = vmatprep.subr.mxu0 0.0
    %1160 = vmatpush1.msra.mxu0 0.0
    %1161 = vmatprep.subr.mxu0 0.0
    %1162 = vmatpush1.msra.mxu0 0.0
    %1163 = vmatprep.subr.mxu0 0.0
    %1164 = vmatpush1.msra.mxu0 0.0
    %1165 = vmatprep.subr.mxu0 0.0
    %1166 = vmatpush1.msra.mxu0 0.0
    %1167 = vmatprep.subr.mxu0 0.0
    %1168 = vmatpush1.msra.mxu0 0.0
    %1169 = vmatprep.subr.mxu0 0.0
    %1170 = vmatpush1.msra.mxu0 0.0
    %1171 = vmatprep.subr.mxu0 0.0
    %1172 = vmatpush1.msra.mxu0 0.0
    %1173 = vmatprep.subr.mxu0 0.0
    %1174 = vmatpush1.msra.mxu0 0.0
    %1175 = vmatprep.subr.mxu0 0.0
    %1176 = vmatpush1.msra.mxu0 0.0
    %1177 = vmatprep.subr.mxu0 0.0
    %1178 = vmatpush1.msra.mxu0 0.0
    %1179 = vmatprep.subr.mxu0 0.0
    %1180 = vmatpush1.msra.mxu0 0.0
    %1181 = vmatprep.subr.mxu0 0.0
    %1182 = vmatpush1.msra.mxu0 0.0
    %1183 = vmatprep.subr.mxu0 0.0
    %1184 = vmatpush1.msra.mxu0 0.0
    %1185 = vmatprep.subr.mxu0 0.0
    %1186 = vmatpush1.msra.mxu0 0.0
    %1187 = vmatprep.subr.mxu0 0.0
    %1188 = vmatpush1.msra.mxu0 0.0
    %1189 = vmatprep.subr.mxu0 0.0
    %1190 = vmatpush1.msra.mxu0 0.0
    %1191 = vmatprep.subr.mxu0 0.0
    %1192 = vmatpush1.msra.mxu0 0.0
    %1193 = vmatprep.subr.mxu0 0.0
    %1194 = vmatpush1.msra.mxu0 0.0
    %1195 = vmatprep.subr.mxu0 0.0
    %1196 = vmatpush1.msra.mxu0 0.0
    %1197 = vmatprep.subr.mxu0 0.0
    %1198 = vmatpush1.msra.mxu0 0.0
    %1199 = vmatprep.subr.mxu0 0.0
    %1200 = vmatpush1.msra.mxu0 0.0
    %1201 = vmatprep.subr.mxu0 0.0
    %1202 = vmatpush1.msra.mxu0 0.0
    %1203 = vmatprep.subr.mxu0 0.0
    %1204 = vmatpush1.msra.mxu0 0.0
    %1205 = vmatprep.mubr.f32.mxu0 0.0
    %1206 = vmatmul.mubr.f32.gmra.mrb[0].mxu0 %v1036
    %v1207 = vpop.f32.mrb[0].mxu0
    %v1208 = vadd.f32 0.0, %v1207
    %v1209 = vpop.f32.mrb[0].mxu0
    %1210 = vmatprep.mubr.f32.mxu0 0.0
    %1211 = vmatmul.mubr.f32.gmra.mrb[0].mxu0 %v1039
    %v1212 = vpop.f32.mrb[0].mxu0
    %v1213 = vadd.f32 0.0, %v1212
    %v1214 = vpop.f32.mrb[0].mxu0
    %1215 = vmatprep.mubr.f32.mxu0 0.0
    %1216 = vmatmul.mubr.f32.gmra.mrb[0].mxu0 %v1042
    %v1217 = vpop.f32.mrb[0].mxu0
    %v1218 = vadd.f32 0.0, %v1217
    %v1219 = vpop.f32.mrb[0].mxu0
    %1220 = vmatprep.mubr.f32.mxu0 0.0
    %1221 = vmatmul.mubr.f32.gmra.mrb[0].mxu0 %v1045
    %v1222 = vpop.f32.mrb[0].mxu0
    %v1223 = vadd.f32 0.0, %v1222
    %v1224 = vpop.f32.mrb[0].mxu0
    %1225 = vdwg.mxu0
    %s1226 = scalar_lea.vmem %s3, 8
    %v1227 = vld [vmem:[%s1226] sm:$0xf]
    %v1229 = vsel %vm1047, %v1227, 0
    %1231 = vmatprep.subr.mxu0 0.0
    %1232 = vmatpush1.msra.mxu0 %v1229
    %1233 = vmatprep.subr.mxu0 0.0
    %1234 = vmatpush1.msra.mxu0 0.0
    %1235 = vmatprep.subr.mxu0 0.0
    %1236 = vmatpush1.msra.mxu0 0.0
    %1237 = vmatprep.subr.mxu0 0.0
    %1238 = vmatpush1.msra.mxu0 0.0
    %1239 = vmatprep.subr.mxu0 0.0
    %1240 = vmatpush1.msra.mxu0 0.0
    %1241 = vmatprep.subr.mxu0 0.0
    %1242 = vmatpush1.msra.mxu0 0.0
    %1243 = vmatprep.subr.mxu0 0.0
    %1244 = vmatpush1.msra.mxu0 0.0
    %1245 = vmatprep.subr.mxu0 0.0
    %1246 = vmatpush1.msra.mxu0 0.0
    %1247 = vmatprep.subr.mxu0 0.0
    %1248 = vmatpush1.msra.mxu0 0.0
    %1249 = vmatprep.subr.mxu0 0.0
    %1250 = vmatpush1.msra.mxu0 0.0
    %1251 = vmatprep.subr.mxu0 0.0
    %1252 = vmatpush1.msra.mxu0 0.0
    %1253 = vmatprep.subr.mxu0 0.0
    %1254 = vmatpush1.msra.mxu0 0.0
    %1255 = vmatprep.subr.mxu0 0.0
    %1256 = vmatpush1.msra.mxu0 0.0
    %1257 = vmatprep.subr.mxu0 0.0
    %1258 = vmatpush1.msra.mxu0 0.0
    %1259 = vmatprep.subr.mxu0 0.0
    %1260 = vmatpush1.msra.mxu0 0.0
    %1261 = vmatprep.subr.mxu0 0.0
    %1262 = vmatpush1.msra.mxu0 0.0
    %1263 = vmatprep.subr.mxu0 0.0
    %1264 = vmatpush1.msra.mxu0 0.0
    %1265 = vmatprep.subr.mxu0 0.0
    %1266 = vmatpush1.msra.mxu0 0.0
    %1267 = vmatprep.subr.mxu0 0.0
    %1268 = vmatpush1.msra.mxu0 0.0
    %1269 = vmatprep.subr.mxu0 0.0
    %1270 = vmatpush1.msra.mxu0 0.0
    %1271 = vmatprep.subr.mxu0 0.0
    %1272 = vmatpush1.msra.mxu0 0.0
    %1273 = vmatprep.subr.mxu0 0.0
    %1274 = vmatpush1.msra.mxu0 0.0
    %1275 = vmatprep.subr.mxu0 0.0
    %1276 = vmatpush1.msra.mxu0 0.0
    %1277 = vmatprep.subr.mxu0 0.0
    %1278 = vmatpush1.msra.mxu0 0.0
    %1279 = vmatprep.subr.mxu0 0.0
    %1280 = vmatpush1.msra.mxu0 0.0
    %1281 = vmatprep.subr.mxu0 0.0
    %1282 = vmatpush1.msra.mxu0 0.0
    %1283 = vmatprep.subr.mxu0 0.0
    %1284 = vmatpush1.msra.mxu0 0.0
    %1285 = vmatprep.subr.mxu0 0.0
    %1286 = vmatpush1.msra.mxu0 0.0
    %1287 = vmatprep.subr.mxu0 0.0
    %1288 = vmatpush1.msra.mxu0 0.0
    %1289 = vmatprep.subr.mxu0 0.0
    %1290 = vmatpush1.msra.mxu0 0.0
    %1291 = vmatprep.subr.mxu0 0.0
    %1292 = vmatpush1.msra.mxu0 0.0
    %1293 = vmatprep.subr.mxu0 0.0
    %1294 = vmatpush1.msra.mxu0 0.0
    %1295 = vmatprep.mubr.f32.mxu0 0.0
    %1296 = vmatmul.mubr.f32.gmra.mrb[0].mxu0 %v1036
    %v1297 = vpop.f32.mrb[0].mxu0
    %v1298 = vadd.f32 0.0, %v1297
    %v1299 = vpop.f32.mrb[0].mxu0
    %1300 = vmatprep.mubr.f32.mxu0 0.0
    %1301 = vmatmul.mubr.f32.gmra.mrb[0].mxu0 %v1039
    %v1302 = vpop.f32.mrb[0].mxu0
    %v1303 = vadd.f32 0.0, %v1302
    %v1304 = vpop.f32.mrb[0].mxu0
    %1305 = vmatprep.mubr.f32.mxu0 0.0
    %1306 = vmatmul.mubr.f32.gmra.mrb[0].mxu0 %v1042
    %v1307 = vpop.f32.mrb[0].mxu0
    %v1308 = vadd.f32 0.0, %v1307
    %v1309 = vpop.f32.mrb[0].mxu0
    %1310 = vmatprep.mubr.f32.mxu0 0.0
    %1311 = vmatmul.mubr.f32.gmra.mrb[0].mxu0 %v1045
    %v1312 = vpop.f32.mrb[0].mxu0
    %v1313 = vadd.f32 0.0, %v1312
    %v1314 = vpop.f32.mrb[0].mxu0
    %1315 = vdwg.mxu0
    %v1316 = vld [vmem:[%s4] sm:$0xff]
    %v1317 = vld [vmem:[%s4 + $0x8] sm:$0xff]
    %v1318 = vld [vmem:[%s4 + $0x10] sm:$0xff]
    %v1319 = vld [vmem:[%s4 + $0x18] sm:$0xff]
    %vm1320 = vcmask 261120
    %v1322 = vsel %vm1320, %v1028, 0
    %v1325 = vsel %vm1320, %v1029, 0
    %v1328 = vsel %vm1320, %v1030, 0
    %v1331 = vsel %vm1320, %v1031, 0
    %1333 = vmatprep.subr.mxu0 0.0
    %1334 = vmatpush1.msra.mxu0 %v1316
    %1335 = vmatprep.subr.mxu0 0.0
    %1336 = vmatpush1.msra.mxu0 %v1317
    %1337 = vmatprep.subr.mxu0 0.0
    %1338 = vmatpush1.msra.mxu0 %v1318
    %1339 = vmatprep.subr.mxu0 0.0
    %1340 = vmatpush1.msra.mxu0 %v1319
    %1341 = vmatprep.subr.mxu0 0.0
    %1342 = vmatpush1.msra.mxu0 0.0
    %1343 = vmatprep.subr.mxu0 0.0
    %1344 = vmatpush1.msra.mxu0 0.0
    %1345 = vmatprep.subr.mxu0 0.0
    %1346 = vmatpush1.msra.mxu0 0.0
    %1347 = vmatprep.subr.mxu0 0.0
    %1348 = vmatpush1.msra.mxu0 0.0
    %1349 = vmatprep.subr.mxu0 0.0
    %1350 = vmatpush1.msra.mxu0 0.0
    %1351 = vmatprep.subr.mxu0 0.0
    %1352 = vmatpush1.msra.mxu0 0.0
    %1353 = vmatprep.subr.mxu0 0.0
    %1354 = vmatpush1.msra.mxu0 0.0
    %1355 = vmatprep.subr.mxu0 0.0
    %1356 = vmatpush1.msra.mxu0 0.0
    %1357 = vmatprep.subr.mxu0 0.0
    %1358 = vmatpush1.msra.mxu0 0.0
    %1359 = vmatprep.subr.mxu0 0.0
    %1360 = vmatpush1.msra.mxu0 0.0
    %1361 = vmatprep.subr.mxu0 0.0
    %1362 = vmatpush1.msra.mxu0 0.0
    %1363 = vmatprep.subr.mxu0 0.0
    %1364 = vmatpush1.msra.mxu0 0.0
    %1365 = vmatprep.subr.mxu0 0.0
    %1366 = vmatpush1.msra.mxu0 0.0
    %1367 = vmatprep.subr.mxu0 0.0
    %1368 = vmatpush1.msra.mxu0 0.0
    %1369 = vmatprep.subr.mxu0 0.0
    %1370 = vmatpush1.msra.mxu0 0.0
    %1371 = vmatprep.subr.mxu0 0.0
    %1372 = vmatpush1.msra.mxu0 0.0
    %1373 = vmatprep.subr.mxu0 0.0
    %1374 = vmatpush1.msra.mxu0 0.0
    %1375 = vmatprep.subr.mxu0 0.0
    %1376 = vmatpush1.msra.mxu0 0.0
    %1377 = vmatprep.subr.mxu0 0.0
    %1378 = vmatpush1.msra.mxu0 0.0
    %1379 = vmatprep.subr.mxu0 0.0
    %1380 = vmatpush1.msra.mxu0 0.0
    %1381 = vmatprep.subr.mxu0 0.0
    %1382 = vmatpush1.msra.mxu0 0.0
    %1383 = vmatprep.subr.mxu0 0.0
    %1384 = vmatpush1.msra.mxu0 0.0
    %1385 = vmatprep.subr.mxu0 0.0
    %1386 = vmatpush1.msra.mxu0 0.0
    %1387 = vmatprep.subr.mxu0 0.0
    %1388 = vmatpush1.msra.mxu0 0.0
    %1389 = vmatprep.subr.mxu0 0.0
    %1390 = vmatpush1.msra.mxu0 0.0
    %1391 = vmatprep.subr.mxu0 0.0
    %1392 = vmatpush1.msra.mxu0 0.0
    %1393 = vmatprep.subr.mxu0 0.0
    %1394 = vmatpush1.msra.mxu0 0.0
    %1395 = vmatprep.subr.mxu0 0.0
    %1396 = vmatpush1.msra.mxu0 0.0
    %1397 = vmatprep.mubr.f32.mxu0 0.0
    %1398 = vmatmul.mubr.f32.gmra.mrb[0].mxu0 %v1322
    %v1399 = vpop.f32.mrb[0].mxu0
    %v1400 = vadd.f32 0.0, %v1399
    %v1401 = vpop.f32.mrb[0].mxu0
    %1402 = vmatprep.mubr.f32.mxu0 0.0
    %1403 = vmatmul.mubr.f32.gmra.mrb[0].mxu0 %v1325
    %v1404 = vpop.f32.mrb[0].mxu0
    %v1405 = vadd.f32 0.0, %v1404
    %v1406 = vpop.f32.mrb[0].mxu0
    %1407 = vmatprep.mubr.f32.mxu0 0.0
    %1408 = vmatmul.mubr.f32.gmra.mrb[0].mxu0 %v1328
    %v1409 = vpop.f32.mrb[0].mxu0
    %v1410 = vadd.f32 0.0, %v1409
    %v1411 = vpop.f32.mrb[0].mxu0
    %1412 = vmatprep.mubr.f32.mxu0 0.0
    %1413 = vmatmul.mubr.f32.gmra.mrb[0].mxu0 %v1331
    %v1414 = vpop.f32.mrb[0].mxu0
    %v1415 = vadd.f32 0.0, %v1414
    %v1416 = vpop.f32.mrb[0].mxu0
    %1417 = vdwg.mxu0
    %v1418 = vadd.f32 %v1118, %v1400
    %v1419 = vadd.f32 %v1123, %v1405
    %v1420 = vadd.f32 %v1128, %v1410
    %v1421 = vadd.f32 %v1133, %v1415
    %s1422 = scalar_lea.vmem %s4, 32
    %v1423 = vld [vmem:[%s1422] sm:$0xff]
    %v1424 = vld [vmem:[%s1422 + $0x8] sm:$0xff]
    %v1425 = vld [vmem:[%s1422 + $0x10] sm:$0xff]
    %v1426 = vld [vmem:[%s1422 + $0x18] sm:$0xff]
    %1427 = vmatprep.subr.mxu0 0.0
    %1428 = vmatpush1.msra.mxu0 %v1423
    %1429 = vmatprep.subr.mxu0 0.0
    %1430 = vmatpush1.msra.mxu0 %v1424
    %1431 = vmatprep.subr.mxu0 0.0
    %1432 = vmatpush1.msra.mxu0 %v1425
    %1433 = vmatprep.subr.mxu0 0.0
    %1434 = vmatpush1.msra.mxu0 %v1426
    %1435 = vmatprep.subr.mxu0 0.0
    %1436 = vmatpush1.msra.mxu0 0.0
    %1437 = vmatprep.subr.mxu0 0.0
    %1438 = vmatpush1.msra.mxu0 0.0
    %1439 = vmatprep.subr.mxu0 0.0
    %1440 = vmatpush1.msra.mxu0 0.0
    %1441 = vmatprep.subr.mxu0 0.0
    %1442 = vmatpush1.msra.mxu0 0.0
    %1443 = vmatprep.subr.mxu0 0.0
    %1444 = vmatpush1.msra.mxu0 0.0
    %1445 = vmatprep.subr.mxu0 0.0
    %1446 = vmatpush1.msra.mxu0 0.0
    %1447 = vmatprep.subr.mxu0 0.0
    %1448 = vmatpush1.msra.mxu0 0.0
    %1449 = vmatprep.subr.mxu0 0.0
    %1450 = vmatpush1.msra.mxu0 0.0
    %1451 = vmatprep.subr.mxu0 0.0
    %1452 = vmatpush1.msra.mxu0 0.0
    %1453 = vmatprep.subr.mxu0 0.0
    %1454 = vmatpush1.msra.mxu0 0.0
    %1455 = vmatprep.subr.mxu0 0.0
    %1456 = vmatpush1.msra.mxu0 0.0
    %1457 = vmatprep.subr.mxu0 0.0
    %1458 = vmatpush1.msra.mxu0 0.0
    %1459 = vmatprep.subr.mxu0 0.0
    %1460 = vmatpush1.msra.mxu0 0.0
    %1461 = vmatprep.subr.mxu0 0.0
    %1462 = vmatpush1.msra.mxu0 0.0
    %1463 = vmatprep.subr.mxu0 0.0
    %1464 = vmatpush1.msra.mxu0 0.0
    %1465 = vmatprep.subr.mxu0 0.0
    %1466 = vmatpush1.msra.mxu0 0.0
    %1467 = vmatprep.subr.mxu0 0.0
    %1468 = vmatpush1.msra.mxu0 0.0
    %1469 = vmatprep.subr.mxu0 0.0
    %1470 = vmatpush1.msra.mxu0 0.0
    %1471 = vmatprep.subr.mxu0 0.0
    %1472 = vmatpush1.msra.mxu0 0.0
    %1473 = vmatprep.subr.mxu0 0.0
    %1474 = vmatpush1.msra.mxu0 0.0
    %1475 = vmatprep.subr.mxu0 0.0
    %1476 = vmatpush1.msra.mxu0 0.0
    %1477 = vmatprep.subr.mxu0 0.0
    %1478 = vmatpush1.msra.mxu0 0.0
    %1479 = vmatprep.subr.mxu0 0.0
    %1480 = vmatpush1.msra.mxu0 0.0
    %1481 = vmatprep.subr.mxu0 0.0
    %1482 = vmatpush1.msra.mxu0 0.0
    %1483 = vmatprep.subr.mxu0 0.0
    %1484 = vmatpush1.msra.mxu0 0.0
    %1485 = vmatprep.subr.mxu0 0.0
    %1486 = vmatpush1.msra.mxu0 0.0
    %1487 = vmatprep.subr.mxu0 0.0
    %1488 = vmatpush1.msra.mxu0 0.0
    %1489 = vmatprep.subr.mxu0 0.0
    %1490 = vmatpush1.msra.mxu0 0.0
    %1491 = vmatprep.mubr.f32.mxu0 0.0
    %1492 = vmatmul.mubr.f32.gmra.mrb[0].mxu0 %v1322
    %v1493 = vpop.f32.mrb[0].mxu0
    %v1494 = vadd.f32 0.0, %v1493
    %v1495 = vpop.f32.mrb[0].mxu0
    %1496 = vmatprep.mubr.f32.mxu0 0.0
    %1497 = vmatmul.mubr.f32.gmra.mrb[0].mxu0 %v1325
    %v1498 = vpop.f32.mrb[0].mxu0
    %v1499 = vadd.f32 0.0, %v1498
    %v1500 = vpop.f32.mrb[0].mxu0
    %1501 = vmatprep.mubr.f32.mxu0 0.0
    %1502 = vmatmul.mubr.f32.gmra.mrb[0].mxu0 %v1328
    %v1503 = vpop.f32.mrb[0].mxu0
    %v1504 = vadd.f32 0.0, %v1503
    %v1505 = vpop.f32.mrb[0].mxu0
    %1506 = vmatprep.mubr.f32.mxu0 0.0
    %1507 = vmatmul.mubr.f32.gmra.mrb[0].mxu0 %v1331
    %v1508 = vpop.f32.mrb[0].mxu0
    %v1509 = vadd.f32 0.0, %v1508
    %v1510 = vpop.f32.mrb[0].mxu0
    %1511 = vdwg.mxu0
    %v1512 = vadd.f32 %v1208, %v1494
    %v1513 = vadd.f32 %v1213, %v1499
    %v1514 = vadd.f32 %v1218, %v1504
    %v1515 = vadd.f32 %v1223, %v1509
    %s1516 = scalar_lea.vmem %s4, 64
    %v1517 = vld [vmem:[%s1516] sm:$0xff]
    %v1518 = vld [vmem:[%s1516 + $0x8] sm:$0xff]
    %v1519 = vld [vmem:[%s1516 + $0x10] sm:$0xff]
    %v1520 = vld [vmem:[%s1516 + $0x18] sm:$0xff]
    %1521 = vmatprep.subr.mxu0 0.0
    %1522 = vmatpush1.msra.mxu0 %v1517
    %1523 = vmatprep.subr.mxu0 0.0
    %1524 = vmatpush1.msra.mxu0 %v1518
    %1525 = vmatprep.subr.mxu0 0.0
    %1526 = vmatpush1.msra.mxu0 %v1519
    %1527 = vmatprep.subr.mxu0 0.0
    %1528 = vmatpush1.msra.mxu0 %v1520
    %1529 = vmatprep.subr.mxu0 0.0
    %1530 = vmatpush1.msra.mxu0 0.0
    %1531 = vmatprep.subr.mxu0 0.0
    %1532 = vmatpush1.msra.mxu0 0.0
    %1533 = vmatprep.subr.mxu0 0.0
    %1534 = vmatpush1.msra.mxu0 0.0
    %1535 = vmatprep.subr.mxu0 0.0
    %1536 = vmatpush1.msra.mxu0 0.0
    %1537 = vmatprep.subr.mxu0 0.0
    %1538 = vmatpush1.msra.mxu0 0.0
    %1539 = vmatprep.subr.mxu0 0.0
    %1540 = vmatpush1.msra.mxu0 0.0
    %1541 = vmatprep.subr.mxu0 0.0
    %1542 = vmatpush1.msra.mxu0 0.0
    %1543 = vmatprep.subr.mxu0 0.0
    %1544 = vmatpush1.msra.mxu0 0.0
    %1545 = vmatprep.subr.mxu0 0.0
    %1546 = vmatpush1.msra.mxu0 0.0
    %1547 = vmatprep.subr.mxu0 0.0
    %1548 = vmatpush1.msra.mxu0 0.0
    %1549 = vmatprep.subr.mxu0 0.0
    %1550 = vmatpush1.msra.mxu0 0.0
    %1551 = vmatprep.subr.mxu0 0.0
    %1552 = vmatpush1.msra.mxu0 0.0
    %1553 = vmatprep.subr.mxu0 0.0
    %1554 = vmatpush1.msra.mxu0 0.0
    %1555 = vmatprep.subr.mxu0 0.0
    %1556 = vmatpush1.msra.mxu0 0.0
    %1557 = vmatprep.subr.mxu0 0.0
    %1558 = vmatpush1.msra.mxu0 0.0
    %1559 = vmatprep.subr.mxu0 0.0
    %1560 = vmatpush1.msra.mxu0 0.0
    %1561 = vmatprep.subr.mxu0 0.0
    %1562 = vmatpush1.msra.mxu0 0.0
    %1563 = vmatprep.subr.mxu0 0.0
    %1564 = vmatpush1.msra.mxu0 0.0
    %1565 = vmatprep.subr.mxu0 0.0
    %1566 = vmatpush1.msra.mxu0 0.0
    %1567 = vmatprep.subr.mxu0 0.0
    %1568 = vmatpush1.msra.mxu0 0.0
    %1569 = vmatprep.subr.mxu0 0.0
    %1570 = vmatpush1.msra.mxu0 0.0
    %1571 = vmatprep.subr.mxu0 0.0
    %1572 = vmatpush1.msra.mxu0 0.0
    %1573 = vmatprep.subr.mxu0 0.0
    %1574 = vmatpush1.msra.mxu0 0.0
    %1575 = vmatprep.subr.mxu0 0.0
    %1576 = vmatpush1.msra.mxu0 0.0
    %1577 = vmatprep.subr.mxu0 0.0
    %1578 = vmatpush1.msra.mxu0 0.0
    %1579 = vmatprep.subr.mxu0 0.0
    %1580 = vmatpush1.msra.mxu0 0.0
    %1581 = vmatprep.subr.mxu0 0.0
    %1582 = vmatpush1.msra.mxu0 0.0
    %1583 = vmatprep.subr.mxu0 0.0
    %1584 = vmatpush1.msra.mxu0 0.0
    %1585 = vmatprep.mubr.f32.mxu0 0.0
    %1586 = vmatmul.mubr.f32.gmra.mrb[0].mxu0 %v1322
    %v1587 = vpop.f32.mrb[0].mxu0
    %v1588 = vadd.f32 0.0, %v1587
    %v1589 = vpop.f32.mrb[0].mxu0
    %1590 = vmatprep.mubr.f32.mxu0 0.0
    %1591 = vmatmul.mubr.f32.gmra.mrb[0].mxu0 %v1325
    %v1592 = vpop.f32.mrb[0].mxu0
    %v1593 = vadd.f32 0.0, %v1592
    %v1594 = vpop.f32.mrb[0].mxu0
    %1595 = vmatprep.mubr.f32.mxu0 0.0
    %1596 = vmatmul.mubr.f32.gmra.mrb[0].mxu0 %v1328
    %v1597 = vpop.f32.mrb[0].mxu0
    %v1598 = vadd.f32 0.0, %v1597
    %v1599 = vpop.f32.mrb[0].mxu0
    %1600 = vmatprep.mubr.f32.mxu0 0.0
    %1601 = vmatmul.mubr.f32.gmra.mrb[0].mxu0 %v1331
    %v1602 = vpop.f32.mrb[0].mxu0
    %v1603 = vadd.f32 0.0, %v1602
    %v1604 = vpop.f32.mrb[0].mxu0
    %1605 = vdwg.mxu0
    %v1606 = vadd.f32 %v1298, %v1588
    %v1607 = vadd.f32 %v1303, %v1593
    %v1608 = vadd.f32 %v1308, %v1598
    %v1609 = vadd.f32 %v1313, %v1603
    %v1610 = vld [vmem:[#allocation2] sm:$0xff]
    %v1611 = vld [vmem:[#allocation2 + $0x8] sm:$0xff]
    %v1612 = vld [vmem:[#allocation2 + $0x10] sm:$0xff]
    %v1613 = vld [vmem:[#allocation2 + $0x18] sm:$0xff]
    %v1615 = vsel %vm1320, %v1610, 0
    %v1618 = vsel %vm1320, %v1611, 0
    %v1621 = vsel %vm1320, %v1612, 0
    %v1624 = vsel %vm1320, %v1613, 0
    %1626 = vmatprep.subr.mxu0 0.0
    %1627 = vmatpush1.msra.mxu0 %v1512
    %1628 = vmatprep.subr.mxu0 0.0
    %1629 = vmatpush1.msra.mxu0 %v1513
    %1630 = vmatprep.subr.mxu0 0.0
    %1631 = vmatpush1.msra.mxu0 %v1514
    %1632 = vmatprep.subr.mxu0 0.0
    %1633 = vmatpush1.msra.mxu0 %v1515
    %1634 = vmatprep.subr.mxu0 0.0
    %1635 = vmatpush1.msra.mxu0 0.0
    %1636 = vmatprep.subr.mxu0 0.0
    %1637 = vmatpush1.msra.mxu0 0.0
    %1638 = vmatprep.subr.mxu0 0.0
    %1639 = vmatpush1.msra.mxu0 0.0
    %1640 = vmatprep.subr.mxu0 0.0
    %1641 = vmatpush1.msra.mxu0 0.0
    %1642 = vmatprep.subr.mxu0 0.0
    %1643 = vmatpush1.msra.mxu0 0.0
    %1644 = vmatprep.subr.mxu0 0.0
    %1645 = vmatpush1.msra.mxu0 0.0
    %1646 = vmatprep.subr.mxu0 0.0
    %1647 = vmatpush1.msra.mxu0 0.0
    %1648 = vmatprep.subr.mxu0 0.0
    %1649 = vmatpush1.msra.mxu0 0.0
    %1650 = vmatprep.subr.mxu0 0.0
    %1651 = vmatpush1.msra.mxu0 0.0
    %1652 = vmatprep.subr.mxu0 0.0
    %1653 = vmatpush1.msra.mxu0 0.0
    %1654 = vmatprep.subr.mxu0 0.0
    %1655 = vmatpush1.msra.mxu0 0.0
    %1656 = vmatprep.subr.mxu0 0.0
    %1657 = vmatpush1.msra.mxu0 0.0
    %1658 = vmatprep.subr.mxu0 0.0
    %1659 = vmatpush1.msra.mxu0 0.0
    %1660 = vmatprep.subr.mxu0 0.0
    %1661 = vmatpush1.msra.mxu0 0.0
    %1662 = vmatprep.subr.mxu0 0.0
    %1663 = vmatpush1.msra.mxu0 0.0
    %1664 = vmatprep.subr.mxu0 0.0
    %1665 = vmatpush1.msra.mxu0 0.0
    %1666 = vmatprep.subr.mxu0 0.0
    %1667 = vmatpush1.msra.mxu0 0.0
    %1668 = vmatprep.subr.mxu0 0.0
    %1669 = vmatpush1.msra.mxu0 0.0
    %1670 = vmatprep.subr.mxu0 0.0
    %1671 = vmatpush1.msra.mxu0 0.0
    %1672 = vmatprep.subr.mxu0 0.0
    %1673 = vmatpush1.msra.mxu0 0.0
    %1674 = vmatprep.subr.mxu0 0.0
    %1675 = vmatpush1.msra.mxu0 0.0
    %1676 = vmatprep.subr.mxu0 0.0
    %1677 = vmatpush1.msra.mxu0 0.0
    %1678 = vmatprep.subr.mxu0 0.0
    %1679 = vmatpush1.msra.mxu0 0.0
    %1680 = vmatprep.subr.mxu0 0.0
    %1681 = vmatpush1.msra.mxu0 0.0
    %1682 = vmatprep.subr.mxu0 0.0
    %1683 = vmatpush1.msra.mxu0 0.0
    %1684 = vmatprep.subr.mxu0 0.0
    %1685 = vmatpush1.msra.mxu0 0.0
    %1686 = vmatprep.subr.mxu0 0.0
    %1687 = vmatpush1.msra.mxu0 0.0
    %1688 = vmatprep.subr.mxu0 0.0
    %1689 = vmatpush1.msra.mxu0 0.0
    %1690 = vmatprep.mubr.f32.mxu0 0.0
    %1691 = vmatmul.mubr.f32.gmra.mrb[0].mxu0 %v1615
    %v1692 = vpop.f32.mrb[0].mxu0
    %v1693 = vadd.f32 0.0, %v1692
    %v1694 = vpop.f32.mrb[0].mxu0
    %1695 = vmatprep.mubr.f32.mxu0 0.0
    %1696 = vmatmul.mubr.f32.gmra.mrb[0].mxu0 %v1618
    %v1697 = vpop.f32.mrb[0].mxu0
    %v1698 = vadd.f32 0.0, %v1697
    %v1699 = vpop.f32.mrb[0].mxu0
    %1700 = vmatprep.mubr.f32.mxu0 0.0
    %1701 = vmatmul.mubr.f32.gmra.mrb[0].mxu0 %v1621
    %v1702 = vpop.f32.mrb[0].mxu0
    %v1703 = vadd.f32 0.0, %v1702
    %v1704 = vpop.f32.mrb[0].mxu0
    %1705 = vmatprep.mubr.f32.mxu0 0.0
    %1706 = vmatmul.mubr.f32.gmra.mrb[0].mxu0 %v1624
    %v1707 = vpop.f32.mrb[0].mxu0
    %v1708 = vadd.f32 0.0, %v1707
    %v1709 = vpop.f32.mrb[0].mxu0
    %1710 = vdwg.mxu0
    %v1711 = vadd.f32 %v1418, %v1693
    %v1712 = vadd.f32 %v1419, %v1698
    %v1713 = vadd.f32 %v1420, %v1703
    %v1714 = vadd.f32 %v1421, %v1708
    %s1715 = scalar_lea.vmem [#allocation2], 32
    %v1716 = vld [vmem:[%s1715] sm:$0xff]
    %v1717 = vld [vmem:[%s1715 + $0x8] sm:$0xff]
    %v1718 = vld [vmem:[%s1715 + $0x10] sm:$0xff]
    %v1719 = vld [vmem:[%s1715 + $0x18] sm:$0xff]
    %v1721 = vsel %vm1320, %v1716, 0
    %v1724 = vsel %vm1320, %v1717, 0
    %v1727 = vsel %vm1320, %v1718, 0
    %v1730 = vsel %vm1320, %v1719, 0
    %1732 = vmatprep.subr.mxu0 0.0
    %1733 = vmatpush1.msra.mxu0 %v1606
    %1734 = vmatprep.subr.mxu0 0.0
    %1735 = vmatpush1.msra.mxu0 %v1607
    %1736 = vmatprep.subr.mxu0 0.0
    %1737 = vmatpush1.msra.mxu0 %v1608
    %1738 = vmatprep.subr.mxu0 0.0
    %1739 = vmatpush1.msra.mxu0 %v1609
    %1740 = vmatprep.subr.mxu0 0.0
    %1741 = vmatpush1.msra.mxu0 0.0
    %1742 = vmatprep.subr.mxu0 0.0
    %1743 = vmatpush1.msra.mxu0 0.0
    %1744 = vmatprep.subr.mxu0 0.0
    %1745 = vmatpush1.msra.mxu0 0.0
    %1746 = vmatprep.subr.mxu0 0.0
    %1747 = vmatpush1.msra.mxu0 0.0
    %1748 = vmatprep.subr.mxu0 0.0
    %1749 = vmatpush1.msra.mxu0 0.0
    %1750 = vmatprep.subr.mxu0 0.0
    %1751 = vmatpush1.msra.mxu0 0.0
    %1752 = vmatprep.subr.mxu0 0.0
    %1753 = vmatpush1.msra.mxu0 0.0
    %1754 = vmatprep.subr.mxu0 0.0
    %1755 = vmatpush1.msra.mxu0 0.0
    %1756 = vmatprep.subr.mxu0 0.0
    %1757 = vmatpush1.msra.mxu0 0.0
    %1758 = vmatprep.subr.mxu0 0.0
    %1759 = vmatpush1.msra.mxu0 0.0
    %1760 = vmatprep.subr.mxu0 0.0
    %1761 = vmatpush1.msra.mxu0 0.0
    %1762 = vmatprep.subr.mxu0 0.0
    %1763 = vmatpush1.msra.mxu0 0.0
    %1764 = vmatprep.subr.mxu0 0.0
    %1765 = vmatpush1.msra.mxu0 0.0
    %1766 = vmatprep.subr.mxu0 0.0
    %1767 = vmatpush1.msra.mxu0 0.0
    %1768 = vmatprep.subr.mxu0 0.0
    %1769 = vmatpush1.msra.mxu0 0.0
    %1770 = vmatprep.subr.mxu0 0.0
    %1771 = vmatpush1.msra.mxu0 0.0
    %1772 = vmatprep.subr.mxu0 0.0
    %1773 = vmatpush1.msra.mxu0 0.0
    %1774 = vmatprep.subr.mxu0 0.0
    %1775 = vmatpush1.msra.mxu0 0.0
    %1776 = vmatprep.subr.mxu0 0.0
    %1777 = vmatpush1.msra.mxu0 0.0
    %1778 = vmatprep.subr.mxu0 0.0
    %1779 = vmatpush1.msra.mxu0 0.0
    %1780 = vmatprep.subr.mxu0 0.0
    %1781 = vmatpush1.msra.mxu0 0.0
    %1782 = vmatprep.subr.mxu0 0.0
    %1783 = vmatpush1.msra.mxu0 0.0
    %1784 = vmatprep.subr.mxu0 0.0
    %1785 = vmatpush1.msra.mxu0 0.0
    %1786 = vmatprep.subr.mxu0 0.0
    %1787 = vmatpush1.msra.mxu0 0.0
    %1788 = vmatprep.subr.mxu0 0.0
    %1789 = vmatpush1.msra.mxu0 0.0
    %1790 = vmatprep.subr.mxu0 0.0
    %1791 = vmatpush1.msra.mxu0 0.0
    %1792 = vmatprep.subr.mxu0 0.0
    %1793 = vmatpush1.msra.mxu0 0.0
    %1794 = vmatprep.subr.mxu0 0.0
    %1795 = vmatpush1.msra.mxu0 0.0
    %1796 = vmatprep.mubr.f32.mxu0 0.0
    %1797 = vmatmul.mubr.f32.gmra.mrb[0].mxu0 %v1721
    %v1798 = vpop.f32.mrb[0].mxu0
    %v1799 = vadd.f32 0.0, %v1798
    %v1800 = vpop.f32.mrb[0].mxu0
    %1801 = vmatprep.mubr.f32.mxu0 0.0
    %1802 = vmatmul.mubr.f32.gmra.mrb[0].mxu0 %v1724
    %v1803 = vpop.f32.mrb[0].mxu0
    %v1804 = vadd.f32 0.0, %v1803
    %v1805 = vpop.f32.mrb[0].mxu0
    %1806 = vmatprep.mubr.f32.mxu0 0.0
    %1807 = vmatmul.mubr.f32.gmra.mrb[0].mxu0 %v1727
    %v1808 = vpop.f32.mrb[0].mxu0
    %v1809 = vadd.f32 0.0, %v1808
    %v1810 = vpop.f32.mrb[0].mxu0
    %1811 = vmatprep.mubr.f32.mxu0 0.0
    %1812 = vmatmul.mubr.f32.gmra.mrb[0].mxu0 %v1730
    %v1813 = vpop.f32.mrb[0].mxu0
    %v1814 = vadd.f32 0.0, %v1813
    %v1815 = vpop.f32.mrb[0].mxu0
    %1816 = vdwg.mxu0
    %v1817 = vadd.f32 %v1711, %v1799
    %v1818 = vadd.f32 %v1712, %v1804
    %v1819 = vadd.f32 %v1713, %v1809
    %v1820 = vadd.f32 %v1714, %v1814
    %v1821 = vlaneseq
    %v1822 = vshrl.u32 %v1821, 7
    %v1823 = vsub.s32 0, %v1822
    %v1824 = vrot.slane %v1032, %v1823
    %v1825 = vadd.f32 %v1817, %v1824
    %v1826 = vadd.f32 %v1818, %v1824
    %v1827 = vadd.f32 %v1819, %v1824
    %v1828 = vadd.f32 %v1820, %v1824
    %v1829 = vxor.u32 %v1825, 2147483648
    %v1830 = vxor.u32 %v1826, 2147483648
    %v1831 = vxor.u32 %v1827, 2147483648
    %v1832 = vxor.u32 %v1828, 2147483648
    %v1833 = vmul.f32 %v1829, 1.442695
    %v1834 = vpow.pop %v1833
    %v1835 = vmul.f32 %v1830, 1.442695
    %v1836 = vpow.pop %v1835
    %v1837 = vmul.f32 %v1831, 1.442695
    %v1838 = vpow.pop %v1837
    %v1839 = vmul.f32 %v1832, 1.442695
    %v1840 = vpow.pop %v1839
    %v1841 = vadd.f32 %v1834, 1.0
    %v1842 = vadd.f32 %v1836, 1.0
    %v1843 = vadd.f32 %v1838, 1.0
    %v1844 = vadd.f32 %v1840, 1.0
    %v1845 = vrcp.pop %v1841
    %v1846 = vmul.f32 1.0, %v1845
    %v1847 = vrcp.pop %v1842
    %v1848 = vmul.f32 1.0, %v1847
    %v1849 = vrcp.pop %v1843
    %v1850 = vmul.f32 1.0, %v1849
    %v1851 = vrcp.pop %v1844
    %v1852 = vmul.f32 1.0, %v1851
    %v1853 = vmul.f32 %v1846, %v1028
    %v1854 = vmul.f32 %v1848, %v1029
    %v1855 = vmul.f32 %v1850, %v1030
    %v1856 = vmul.f32 %v1852, %v1031
    %1861 = vrot.lane.b32.xlu0 %v1316, 64
    %v1862 = vpop.permute.xlu0 %1861
    %1863 = vrot.lane.b32.xlu0 %v1317, 64
    %v1864 = vpop.permute.xlu0 %1863
    %1865 = vrot.lane.b32.xlu0 %v1318, 64
    %v1866 = vpop.permute.xlu0 %1865
    %1867 = vrot.lane.b32.xlu0 %v1319, 64
    %v1868 = vpop.permute.xlu0 %1867
    %v1874 = vsel %vm1320, %v1853, 0
    %v1877 = vsel %vm1320, %v1854, 0
    %v1880 = vsel %vm1320, %v1855, 0
    %v1883 = vsel %vm1320, %v1856, 0
    %1885 = vmatprep.subr.mxu0 0.0
    %1886 = vmatpush1.msra.mxu0 %v1862
    %1887 = vmatprep.subr.mxu0 0.0
    %1888 = vmatpush1.msra.mxu0 %v1864
    %1889 = vmatprep.subr.mxu0 0.0
    %1890 = vmatpush1.msra.mxu0 %v1866
    %1891 = vmatprep.subr.mxu0 0.0
    %1892 = vmatpush1.msra.mxu0 %v1868
    %1893 = vmatprep.subr.mxu0 0.0
    %1894 = vmatpush1.msra.mxu0 0.0
    %1895 = vmatprep.subr.mxu0 0.0
    %1896 = vmatpush1.msra.mxu0 0.0
    %1897 = vmatprep.subr.mxu0 0.0
    %1898 = vmatpush1.msra.mxu0 0.0
    %1899 = vmatprep.subr.mxu0 0.0
    %1900 = vmatpush1.msra.mxu0 0.0
    %1901 = vmatprep.subr.mxu0 0.0
    %1902 = vmatpush1.msra.mxu0 0.0
    %1903 = vmatprep.subr.mxu0 0.0
    %1904 = vmatpush1.msra.mxu0 0.0
    %1905 = vmatprep.subr.mxu0 0.0
    %1906 = vmatpush1.msra.mxu0 0.0
    %1907 = vmatprep.subr.mxu0 0.0
    %1908 = vmatpush1.msra.mxu0 0.0
    %1909 = vmatprep.subr.mxu0 0.0
    %1910 = vmatpush1.msra.mxu0 0.0
    %1911 = vmatprep.subr.mxu0 0.0
    %1912 = vmatpush1.msra.mxu0 0.0
    %1913 = vmatprep.subr.mxu0 0.0
    %1914 = vmatpush1.msra.mxu0 0.0
    %1915 = vmatprep.subr.mxu0 0.0
    %1916 = vmatpush1.msra.mxu0 0.0
    %1917 = vmatprep.subr.mxu0 0.0
    %1918 = vmatpush1.msra.mxu0 0.0
    %1919 = vmatprep.subr.mxu0 0.0
    %1920 = vmatpush1.msra.mxu0 0.0
    %1921 = vmatprep.subr.mxu0 0.0
    %1922 = vmatpush1.msra.mxu0 0.0
    %1923 = vmatprep.subr.mxu0 0.0
    %1924 = vmatpush1.msra.mxu0 0.0
    %1925 = vmatprep.subr.mxu0 0.0
    %1926 = vmatpush1.msra.mxu0 0.0
    %1927 = vmatprep.subr.mxu0 0.0
    %1928 = vmatpush1.msra.mxu0 0.0
    %1929 = vmatprep.subr.mxu0 0.0
    %1930 = vmatpush1.msra.mxu0 0.0
    %1931 = vmatprep.subr.mxu0 0.0
    %1932 = vmatpush1.msra.mxu0 0.0
    %1933 = vmatprep.subr.mxu0 0.0
    %1934 = vmatpush1.msra.mxu0 0.0
    %1935 = vmatprep.subr.mxu0 0.0
    %1936 = vmatpush1.msra.mxu0 0.0
    %1937 = vmatprep.subr.mxu0 0.0
    %1938 = vmatpush1.msra.mxu0 0.0
    %1939 = vmatprep.subr.mxu0 0.0
    %1940 = vmatpush1.msra.mxu0 0.0
    %1941 = vmatprep.subr.mxu0 0.0
    %1942 = vmatpush1.msra.mxu0 0.0
    %1943 = vmatprep.subr.mxu0 0.0
    %1944 = vmatpush1.msra.mxu0 0.0
    %1945 = vmatprep.subr.mxu0 0.0
    %1946 = vmatpush1.msra.mxu0 0.0
    %1947 = vmatprep.subr.mxu0 0.0
    %1948 = vmatpush1.msra.mxu0 0.0
    %1949 = vmatprep.mubr.f32.mxu0 0.0
    %1950 = vmatmul.mubr.f32.gmra.mrb[0].mxu0 %v1874
    %v1951 = vpop.f32.mrb[0].mxu0
    %v1952 = vadd.f32 0.0, %v1951
    %v1953 = vpop.f32.mrb[0].mxu0
    %1954 = vmatprep.mubr.f32.mxu0 0.0
    %1955 = vmatmul.mubr.f32.gmra.mrb[0].mxu0 %v1877
    %v1956 = vpop.f32.mrb[0].mxu0
    %v1957 = vadd.f32 0.0, %v1956
    %v1958 = vpop.f32.mrb[0].mxu0
    %1959 = vmatprep.mubr.f32.mxu0 0.0
    %1960 = vmatmul.mubr.f32.gmra.mrb[0].mxu0 %v1880
    %v1961 = vpop.f32.mrb[0].mxu0
    %v1962 = vadd.f32 0.0, %v1961
    %v1963 = vpop.f32.mrb[0].mxu0
    %1964 = vmatprep.mubr.f32.mxu0 0.0
    %1965 = vmatmul.mubr.f32.gmra.mrb[0].mxu0 %v1883
    %v1966 = vpop.f32.mrb[0].mxu0
    %v1967 = vadd.f32 0.0, %v1966
    %v1968 = vpop.f32.mrb[0].mxu0
    %1969 = vdwg.mxu0
    %1974 = vrot.lane.b32.xlu0 %v1952, 64
    %v1975 = vpop.permute.xlu0 %1974
    %1976 = vrot.lane.b32.xlu0 %v1957, 64
    %v1977 = vpop.permute.xlu0 %1976
    %1978 = vrot.lane.b32.xlu0 %v1962, 64
    %v1979 = vpop.permute.xlu0 %1978
    %1980 = vrot.lane.b32.xlu0 %v1967, 64
    %v1981 = vpop.permute.xlu0 %1980
    %v1986 = vadd.f32 %v1118, %v1975
    %v1987 = vadd.f32 %v1123, %v1977
    %v1988 = vadd.f32 %v1128, %v1979
    %v1989 = vadd.f32 %v1133, %v1981
    %1994 = vrot.lane.b32.xlu0 %v1423, 64
    %v1995 = vpop.permute.xlu0 %1994
    %1996 = vrot.lane.b32.xlu0 %v1424, 64
    %v1997 = vpop.permute.xlu0 %1996
    %1998 = vrot.lane.b32.xlu0 %v1425, 64
    %v1999 = vpop.permute.xlu0 %1998
    %2000 = vrot.lane.b32.xlu0 %v1426, 64
    %v2001 = vpop.permute.xlu0 %2000
    %2006 = vmatprep.subr.mxu0 0.0
    %2007 = vmatpush1.msra.mxu0 %v1995
    %2008 = vmatprep.subr.mxu0 0.0
    %2009 = vmatpush1.msra.mxu0 %v1997
    %2010 = vmatprep.subr.mxu0 0.0
    %2011 = vmatpush1.msra.mxu0 %v1999
    %2012 = vmatprep.subr.mxu0 0.0
    %2013 = vmatpush1.msra.mxu0 %v2001
    %2014 = vmatprep.subr.mxu0 0.0
    %2015 = vmatpush1.msra.mxu0 0.0
    %2016 = vmatprep.subr.mxu0 0.0
    %2017 = vmatpush1.msra.mxu0 0.0
    %2018 = vmatprep.subr.mxu0 0.0
    %2019 = vmatpush1.msra.mxu0 0.0
    %2020 = vmatprep.subr.mxu0 0.0
    %2021 = vmatpush1.msra.mxu0 0.0
    %2022 = vmatprep.subr.mxu0 0.0
    %2023 = vmatpush1.msra.mxu0 0.0
    %2024 = vmatprep.subr.mxu0 0.0
    %2025 = vmatpush1.msra.mxu0 0.0
    %2026 = vmatprep.subr.mxu0 0.0
    %2027 = vmatpush1.msra.mxu0 0.0
    %2028 = vmatprep.subr.mxu0 0.0
    %2029 = vmatpush1.msra.mxu0 0.0
    %2030 = vmatprep.subr.mxu0 0.0
    %2031 = vmatpush1.msra.mxu0 0.0
    %2032 = vmatprep.subr.mxu0 0.0
    %2033 = vmatpush1.msra.mxu0 0.0
    %2034 = vmatprep.subr.mxu0 0.0
    %2035 = vmatpush1.msra.mxu0 0.0
    %2036 = vmatprep.subr.mxu0 0.0
    %2037 = vmatpush1.msra.mxu0 0.0
    %2038 = vmatprep.subr.mxu0 0.0
    %2039 = vmatpush1.msra.mxu0 0.0
    %2040 = vmatprep.subr.mxu0 0.0
    %2041 = vmatpush1.msra.mxu0 0.0
    %2042 = vmatprep.subr.mxu0 0.0
    %2043 = vmatpush1.msra.mxu0 0.0
    %2044 = vmatprep.subr.mxu0 0.0
    %2045 = vmatpush1.msra.mxu0 0.0
    %2046 = vmatprep.subr.mxu0 0.0
    %2047 = vmatpush1.msra.mxu0 0.0
    %2048 = vmatprep.subr.mxu0 0.0
    %2049 = vmatpush1.msra.mxu0 0.0
    %2050 = vmatprep.subr.mxu0 0.0
    %2051 = vmatpush1.msra.mxu0 0.0
    %2052 = vmatprep.subr.mxu0 0.0
    %2053 = vmatpush1.msra.mxu0 0.0
    %2054 = vmatprep.subr.mxu0 0.0
    %2055 = vmatpush1.msra.mxu0 0.0
    %2056 = vmatprep.subr.mxu0 0.0
    %2057 = vmatpush1.msra.mxu0 0.0
    %2058 = vmatprep.subr.mxu0 0.0
    %2059 = vmatpush1.msra.mxu0 0.0
    %2060 = vmatprep.subr.mxu0 0.0
    %2061 = vmatpush1.msra.mxu0 0.0
    %2062 = vmatprep.subr.mxu0 0.0
    %2063 = vmatpush1.msra.mxu0 0.0
    %2064 = vmatprep.subr.mxu0 0.0
    %2065 = vmatpush1.msra.mxu0 0.0
    %2066 = vmatprep.subr.mxu0 0.0
    %2067 = vmatpush1.msra.mxu0 0.0
    %2068 = vmatprep.subr.mxu0 0.0
    %2069 = vmatpush1.msra.mxu0 0.0
    %2070 = vmatprep.mubr.f32.mxu0 0.0
    %2071 = vmatmul.mubr.f32.gmra.mrb[0].mxu0 %v1874
    %v2072 = vpop.f32.mrb[0].mxu0
    %v2073 = vadd.f32 0.0, %v2072
    %v2074 = vpop.f32.mrb[0].mxu0
    %2075 = vmatprep.mubr.f32.mxu0 0.0
    %2076 = vmatmul.mubr.f32.gmra.mrb[0].mxu0 %v1877
    %v2077 = vpop.f32.mrb[0].mxu0
    %v2078 = vadd.f32 0.0, %v2077
    %v2079 = vpop.f32.mrb[0].mxu0
    %2080 = vmatprep.mubr.f32.mxu0 0.0
    %2081 = vmatmul.mubr.f32.gmra.mrb[0].mxu0 %v1880
    %v2082 = vpop.f32.mrb[0].mxu0
    %v2083 = vadd.f32 0.0, %v2082
    %v2084 = vpop.f32.mrb[0].mxu0
    %2085 = vmatprep.mubr.f32.mxu0 0.0
    %2086 = vmatmul.mubr.f32.gmra.mrb[0].mxu0 %v1883
    %v2087 = vpop.f32.mrb[0].mxu0
    %v2088 = vadd.f32 0.0, %v2087
    %v2089 = vpop.f32.mrb[0].mxu0
    %2090 = vdwg.mxu0
    %2095 = vrot.lane.b32.xlu0 %v2073, 64
    %v2096 = vpop.permute.xlu0 %2095
    %2097 = vrot.lane.b32.xlu0 %v2078, 64
    %v2098 = vpop.permute.xlu0 %2097
    %2099 = vrot.lane.b32.xlu0 %v2083, 64
    %v2100 = vpop.permute.xlu0 %2099
    %2101 = vrot.lane.b32.xlu0 %v2088, 64
    %v2102 = vpop.permute.xlu0 %2101
    %v2107 = vadd.f32 %v1208, %v2096
    %v2108 = vadd.f32 %v1213, %v2098
    %v2109 = vadd.f32 %v1218, %v2100
    %v2110 = vadd.f32 %v1223, %v2102
    %2115 = vrot.lane.b32.xlu0 %v1517, 64
    %v2116 = vpop.permute.xlu0 %2115
    %2117 = vrot.lane.b32.xlu0 %v1518, 64
    %v2118 = vpop.permute.xlu0 %2117
    %2119 = vrot.lane.b32.xlu0 %v1519, 64
    %v2120 = vpop.permute.xlu0 %2119
    %2121 = vrot.lane.b32.xlu0 %v1520, 64
    %v2122 = vpop.permute.xlu0 %2121
    %2127 = vmatprep.subr.mxu0 0.0
    %2128 = vmatpush1.msra.mxu0 %v2116
    %2129 = vmatprep.subr.mxu0 0.0
    %2130 = vmatpush1.msra.mxu0 %v2118
    %2131 = vmatprep.subr.mxu0 0.0
    %2132 = vmatpush1.msra.mxu0 %v2120
    %2133 = vmatprep.subr.mxu0 0.0
    %2134 = vmatpush1.msra.mxu0 %v2122
    %2135 = vmatprep.subr.mxu0 0.0
    %2136 = vmatpush1.msra.mxu0 0.0
    %2137 = vmatprep.subr.mxu0 0.0
    %2138 = vmatpush1.msra.mxu0 0.0
    %2139 = vmatprep.subr.mxu0 0.0
    %2140 = vmatpush1.msra.mxu0 0.0
    %2141 = vmatprep.subr.mxu0 0.0
    %2142 = vmatpush1.msra.mxu0 0.0
    %2143 = vmatprep.subr.mxu0 0.0
    %2144 = vmatpush1.msra.mxu0 0.0
    %2145 = vmatprep.subr.mxu0 0.0
    %2146 = vmatpush1.msra.mxu0 0.0
    %2147 = vmatprep.subr.mxu0 0.0
    %2148 = vmatpush1.msra.mxu0 0.0
    %2149 = vmatprep.subr.mxu0 0.0
    %2150 = vmatpush1.msra.mxu0 0.0
    %2151 = vmatprep.subr.mxu0 0.0
    %2152 = vmatpush1.msra.mxu0 0.0
    %2153 = vmatprep.subr.mxu0 0.0
    %2154 = vmatpush1.msra.mxu0 0.0
    %2155 = vmatprep.subr.mxu0 0.0
    %2156 = vmatpush1.msra.mxu0 0.0
    %2157 = vmatprep.subr.mxu0 0.0
    %2158 = vmatpush1.msra.mxu0 0.0
    %2159 = vmatprep.subr.mxu0 0.0
    %2160 = vmatpush1.msra.mxu0 0.0
    %2161 = vmatprep.subr.mxu0 0.0
    %2162 = vmatpush1.msra.mxu0 0.0
    %2163 = vmatprep.subr.mxu0 0.0
    %2164 = vmatpush1.msra.mxu0 0.0
    %2165 = vmatprep.subr.mxu0 0.0
    %2166 = vmatpush1.msra.mxu0 0.0
    %2167 = vmatprep.subr.mxu0 0.0
    %2168 = vmatpush1.msra.mxu0 0.0
    %2169 = vmatprep.subr.mxu0 0.0
    %2170 = vmatpush1.msra.mxu0 0.0
    %2171 = vmatprep.subr.mxu0 0.0
    %2172 = vmatpush1.msra.mxu0 0.0
    %2173 = vmatprep.subr.mxu0 0.0
    %2174 = vmatpush1.msra.mxu0 0.0
    %2175 = vmatprep.subr.mxu0 0.0
    %2176 = vmatpush1.msra.mxu0 0.0
    %2177 = vmatprep.subr.mxu0 0.0
    %2178 = vmatpush1.msra.mxu0 0.0
    %2179 = vmatprep.subr.mxu0 0.0
    %2180 = vmatpush1.msra.mxu0 0.0
    %2181 = vmatprep.subr.mxu0 0.0
    %2182 = vmatpush1.msra.mxu0 0.0
    %2183 = vmatprep.subr.mxu0 0.0
    %2184 = vmatpush1.msra.mxu0 0.0
    %2185 = vmatprep.subr.mxu0 0.0
    %2186 = vmatpush1.msra.mxu0 0.0
    %2187 = vmatprep.subr.mxu0 0.0
    %2188 = vmatpush1.msra.mxu0 0.0
    %2189 = vmatprep.subr.mxu0 0.0
    %2190 = vmatpush1.msra.mxu0 0.0
    %2191 = vmatprep.mubr.f32.mxu0 0.0
    %2192 = vmatmul.mubr.f32.gmra.mrb[0].mxu0 %v1874
    %v2193 = vpop.f32.mrb[0].mxu0
    %v2194 = vadd.f32 0.0, %v2193
    %v2195 = vpop.f32.mrb[0].mxu0
    %2196 = vmatprep.mubr.f32.mxu0 0.0
    %2197 = vmatmul.mubr.f32.gmra.mrb[0].mxu0 %v1877
    %v2198 = vpop.f32.mrb[0].mxu0
    %v2199 = vadd.f32 0.0, %v2198
    %v2200 = vpop.f32.mrb[0].mxu0
    %2201 = vmatprep.mubr.f32.mxu0 0.0
    %2202 = vmatmul.mubr.f32.gmra.mrb[0].mxu0 %v1880
    %v2203 = vpop.f32.mrb[0].mxu0
    %v2204 = vadd.f32 0.0, %v2203
    %v2205 = vpop.f32.mrb[0].mxu0
    %2206 = vmatprep.mubr.f32.mxu0 0.0
    %2207 = vmatmul.mubr.f32.gmra.mrb[0].mxu0 %v1883
    %v2208 = vpop.f32.mrb[0].mxu0
    %v2209 = vadd.f32 0.0, %v2208
    %v2210 = vpop.f32.mrb[0].mxu0
    %2211 = vdwg.mxu0
    %2216 = vrot.lane.b32.xlu0 %v2194, 64
    %v2217 = vpop.permute.xlu0 %2216
    %2218 = vrot.lane.b32.xlu0 %v2199, 64
    %v2219 = vpop.permute.xlu0 %2218
    %2220 = vrot.lane.b32.xlu0 %v2204, 64
    %v2221 = vpop.permute.xlu0 %2220
    %2222 = vrot.lane.b32.xlu0 %v2209, 64
    %v2223 = vpop.permute.xlu0 %2222
    %v2228 = vadd.f32 %v1298, %v2217
    %v2229 = vadd.f32 %v1303, %v2219
    %v2230 = vadd.f32 %v1308, %v2221
    %v2231 = vadd.f32 %v1313, %v2223
    %2236 = vrot.lane.b32.xlu0 %v2107, 64
    %v2237 = vpop.permute.xlu0 %2236
    %2238 = vrot.lane.b32.xlu0 %v2108, 64
    %v2239 = vpop.permute.xlu0 %2238
    %2240 = vrot.lane.b32.xlu0 %v2109, 64
    %v2241 = vpop.permute.xlu0 %2240
    %2242 = vrot.lane.b32.xlu0 %v2110, 64
    %v2243 = vpop.permute.xlu0 %2242
    %2248 = vmatprep.subr.mxu0 0.0
    %2249 = vmatpush1.msra.mxu0 %v2237
    %2250 = vmatprep.subr.mxu0 0.0
    %2251 = vmatpush1.msra.mxu0 %v2239
    %2252 = vmatprep.subr.mxu0 0.0
    %2253 = vmatpush1.msra.mxu0 %v2241
    %2254 = vmatprep.subr.mxu0 0.0
    %2255 = vmatpush1.msra.mxu0 %v2243
    %2256 = vmatprep.subr.mxu0 0.0
    %2257 = vmatpush1.msra.mxu0 0.0
    %2258 = vmatprep.subr.mxu0 0.0
    %2259 = vmatpush1.msra.mxu0 0.0
    %2260 = vmatprep.subr.mxu0 0.0
    %2261 = vmatpush1.msra.mxu0 0.0
    %2262 = vmatprep.subr.mxu0 0.0
    %2263 = vmatpush1.msra.mxu0 0.0
    %2264 = vmatprep.subr.mxu0 0.0
    %2265 = vmatpush1.msra.mxu0 0.0
    %2266 = vmatprep.subr.mxu0 0.0
    %2267 = vmatpush1.msra.mxu0 0.0
    %2268 = vmatprep.subr.mxu0 0.0
    %2269 = vmatpush1.msra.mxu0 0.0
    %2270 = vmatprep.subr.mxu0 0.0
    %2271 = vmatpush1.msra.mxu0 0.0
    %2272 = vmatprep.subr.mxu0 0.0
    %2273 = vmatpush1.msra.mxu0 0.0
    %2274 = vmatprep.subr.mxu0 0.0
    %2275 = vmatpush1.msra.mxu0 0.0
    %2276 = vmatprep.subr.mxu0 0.0
    %2277 = vmatpush1.msra.mxu0 0.0
    %2278 = vmatprep.subr.mxu0 0.0
    %2279 = vmatpush1.msra.mxu0 0.0
    %2280 = vmatprep.subr.mxu0 0.0
    %2281 = vmatpush1.msra.mxu0 0.0
    %2282 = vmatprep.subr.mxu0 0.0
    %2283 = vmatpush1.msra.mxu0 0.0
    %2284 = vmatprep.subr.mxu0 0.0
    %2285 = vmatpush1.msra.mxu0 0.0
    %2286 = vmatprep.subr.mxu0 0.0
    %2287 = vmatpush1.msra.mxu0 0.0
    %2288 = vmatprep.subr.mxu0 0.0
    %2289 = vmatpush1.msra.mxu0 0.0
    %2290 = vmatprep.subr.mxu0 0.0
    %2291 = vmatpush1.msra.mxu0 0.0
    %2292 = vmatprep.subr.mxu0 0.0
    %2293 = vmatpush1.msra.mxu0 0.0
    %2294 = vmatprep.subr.mxu0 0.0
    %2295 = vmatpush1.msra.mxu0 0.0
    %2296 = vmatprep.subr.mxu0 0.0
    %2297 = vmatpush1.msra.mxu0 0.0
    %2298 = vmatprep.subr.mxu0 0.0
    %2299 = vmatpush1.msra.mxu0 0.0
    %2300 = vmatprep.subr.mxu0 0.0
    %2301 = vmatpush1.msra.mxu0 0.0
    %2302 = vmatprep.subr.mxu0 0.0
    %2303 = vmatpush1.msra.mxu0 0.0
    %2304 = vmatprep.subr.mxu0 0.0
    %2305 = vmatpush1.msra.mxu0 0.0
    %2306 = vmatprep.subr.mxu0 0.0
    %2307 = vmatpush1.msra.mxu0 0.0
    %2308 = vmatprep.subr.mxu0 0.0
    %2309 = vmatpush1.msra.mxu0 0.0
    %2310 = vmatprep.subr.mxu0 0.0
    %2311 = vmatpush1.msra.mxu0 0.0
    %2312 = vmatprep.mubr.f32.mxu0 0.0
    %2313 = vmatmul.mubr.f32.gmra.mrb[0].mxu0 %v1615
    %v2314 = vpop.f32.mrb[0].mxu0
    %v2315 = vadd.f32 0.0, %v2314
    %v2316 = vpop.f32.mrb[0].mxu0
    %2317 = vmatprep.mubr.f32.mxu0 0.0
    %2318 = vmatmul.mubr.f32.gmra.mrb[0].mxu0 %v1618
    %v2319 = vpop.f32.mrb[0].mxu0
    %v2320 = vadd.f32 0.0, %v2319
    %v2321 = vpop.f32.mrb[0].mxu0
    %2322 = vmatprep.mubr.f32.mxu0 0.0
    %2323 = vmatmul.mubr.f32.gmra.mrb[0].mxu0 %v1621
    %v2324 = vpop.f32.mrb[0].mxu0
    %v2325 = vadd.f32 0.0, %v2324
    %v2326 = vpop.f32.mrb[0].mxu0
    %2327 = vmatprep.mubr.f32.mxu0 0.0
    %2328 = vmatmul.mubr.f32.gmra.mrb[0].mxu0 %v1624
    %v2329 = vpop.f32.mrb[0].mxu0
    %v2330 = vadd.f32 0.0, %v2329
    %v2331 = vpop.f32.mrb[0].mxu0
    %2332 = vdwg.mxu0
    %2337 = vrot.lane.b32.xlu0 %v2315, 64
    %v2338 = vpop.permute.xlu0 %2337
    %2339 = vrot.lane.b32.xlu0 %v2320, 64
    %v2340 = vpop.permute.xlu0 %2339
    %2341 = vrot.lane.b32.xlu0 %v2325, 64
    %v2342 = vpop.permute.xlu0 %2341
    %2343 = vrot.lane.b32.xlu0 %v2330, 64
    %v2344 = vpop.permute.xlu0 %2343
    %v2349 = vadd.f32 %v1986, %v2338
    %v2350 = vadd.f32 %v1987, %v2340
    %v2351 = vadd.f32 %v1988, %v2342
    %v2352 = vadd.f32 %v1989, %v2344
    %2357 = vrot.lane.b32.xlu0 %v2228, 64
    %v2358 = vpop.permute.xlu0 %2357
    %2359 = vrot.lane.b32.xlu0 %v2229, 64
    %v2360 = vpop.permute.xlu0 %2359
    %2361 = vrot.lane.b32.xlu0 %v2230, 64
    %v2362 = vpop.permute.xlu0 %2361
    %2363 = vrot.lane.b32.xlu0 %v2231, 64
    %v2364 = vpop.permute.xlu0 %2363
    %2369 = vmatprep.subr.mxu0 0.0
    %2370 = vmatpush1.msra.mxu0 %v2358
    %2371 = vmatprep.subr.mxu0 0.0
    %2372 = vmatpush1.msra.mxu0 %v2360
    %2373 = vmatprep.subr.mxu0 0.0
    %2374 = vmatpush1.msra.mxu0 %v2362
    %2375 = vmatprep.subr.mxu0 0.0
    %2376 = vmatpush1.msra.mxu0 %v2364
    %2377 = vmatprep.subr.mxu0 0.0
    %2378 = vmatpush1.msra.mxu0 0.0
    %2379 = vmatprep.subr.mxu0 0.0
    %2380 = vmatpush1.msra.mxu0 0.0
    %2381 = vmatprep.subr.mxu0 0.0
    %2382 = vmatpush1.msra.mxu0 0.0
    %2383 = vmatprep.subr.mxu0 0.0
    %2384 = vmatpush1.msra.mxu0 0.0
    %2385 = vmatprep.subr.mxu0 0.0
    %2386 = vmatpush1.msra.mxu0 0.0
    %2387 = vmatprep.subr.mxu0 0.0
    %2388 = vmatpush1.msra.mxu0 0.0
    %2389 = vmatprep.subr.mxu0 0.0
    %2390 = vmatpush1.msra.mxu0 0.0
    %2391 = vmatprep.subr.mxu0 0.0
    %2392 = vmatpush1.msra.mxu0 0.0
    %2393 = vmatprep.subr.mxu0 0.0
    %2394 = vmatpush1.msra.mxu0 0.0
    %2395 = vmatprep.subr.mxu0 0.0
    %2396 = vmatpush1.msra.mxu0 0.0
    %2397 = vmatprep.subr.mxu0 0.0
    %2398 = vmatpush1.msra.mxu0 0.0
    %2399 = vmatprep.subr.mxu0 0.0
    %2400 = vmatpush1.msra.mxu0 0.0
    %2401 = vmatprep.subr.mxu0 0.0
    %2402 = vmatpush1.msra.mxu0 0.0
    %2403 = vmatprep.subr.mxu0 0.0
    %2404 = vmatpush1.msra.mxu0 0.0
    %2405 = vmatprep.subr.mxu0 0.0
    %2406 = vmatpush1.msra.mxu0 0.0
    %2407 = vmatprep.subr.mxu0 0.0
    %2408 = vmatpush1.msra.mxu0 0.0
    %2409 = vmatprep.subr.mxu0 0.0
    %2410 = vmatpush1.msra.mxu0 0.0
    %2411 = vmatprep.subr.mxu0 0.0
    %2412 = vmatpush1.msra.mxu0 0.0
    %2413 = vmatprep.subr.mxu0 0.0
    %2414 = vmatpush1.msra.mxu0 0.0
    %2415 = vmatprep.subr.mxu0 0.0
    %2416 = vmatpush1.msra.mxu0 0.0
    %2417 = vmatprep.subr.mxu0 0.0
    %2418 = vmatpush1.msra.mxu0 0.0
    %2419 = vmatprep.subr.mxu0 0.0
    %2420 = vmatpush1.msra.mxu0 0.0
    %2421 = vmatprep.subr.mxu0 0.0
    %2422 = vmatpush1.msra.mxu0 0.0
    %2423 = vmatprep.subr.mxu0 0.0
    %2424 = vmatpush1.msra.mxu0 0.0
    %2425 = vmatprep.subr.mxu0 0.0
    %2426 = vmatpush1.msra.mxu0 0.0
    %2427 = vmatprep.subr.mxu0 0.0
    %2428 = vmatpush1.msra.mxu0 0.0
    %2429 = vmatprep.subr.mxu0 0.0
    %2430 = vmatpush1.msra.mxu0 0.0
    %2431 = vmatprep.subr.mxu0 0.0
    %2432 = vmatpush1.msra.mxu0 0.0
    %2433 = vmatprep.mubr.f32.mxu0 0.0
    %2434 = vmatmul.mubr.f32.gmra.mrb[0].mxu0 %v1721
    %v2435 = vpop.f32.mrb[0].mxu0
    %v2436 = vadd.f32 0.0, %v2435
    %v2437 = vpop.f32.mrb[0].mxu0
    %2438 = vmatprep.mubr.f32.mxu0 0.0
    %2439 = vmatmul.mubr.f32.gmra.mrb[0].mxu0 %v1724
    %v2440 = vpop.f32.mrb[0].mxu0
    %v2441 = vadd.f32 0.0, %v2440
    %v2442 = vpop.f32.mrb[0].mxu0
    %2443 = vmatprep.mubr.f32.mxu0 0.0
    %2444 = vmatmul.mubr.f32.gmra.mrb[0].mxu0 %v1727
    %v2445 = vpop.f32.mrb[0].mxu0
    %v2446 = vadd.f32 0.0, %v2445
    %v2447 = vpop.f32.mrb[0].mxu0
    %2448 = vmatprep.mubr.f32.mxu0 0.0
    %2449 = vmatmul.mubr.f32.gmra.mrb[0].mxu0 %v1730
    %v2450 = vpop.f32.mrb[0].mxu0
    %v2451 = vadd.f32 0.0, %v2450
    %v2452 = vpop.f32.mrb[0].mxu0
    %2453 = vdwg.mxu0
    %2458 = vrot.lane.b32.xlu0 %v2436, 64
    %v2459 = vpop.permute.xlu0 %2458
    %2460 = vrot.lane.b32.xlu0 %v2441, 64
    %v2461 = vpop.permute.xlu0 %2460
    %2462 = vrot.lane.b32.xlu0 %v2446, 64
    %v2463 = vpop.permute.xlu0 %2462
    %2464 = vrot.lane.b32.xlu0 %v2451, 64
    %v2465 = vpop.permute.xlu0 %2464
    %v2470 = vadd.f32 %v2349, %v2459
    %v2471 = vadd.f32 %v2350, %v2461
    %v2472 = vadd.f32 %v2351, %v2463
    %v2473 = vadd.f32 %v2352, %v2465
    %v2474 = vlaneseq
    %v2475 = vshrl.u32 %v2474, 7
    %v2476 = vsub.s32 1, %v2475
    %v2477 = vrot.slane %v1032, %v2476
    %2479 = vrot.lane.b32.xlu0 %v2477, 64
    %v2480 = vpop.permute.xlu0 %2479
    %v2482 = vadd.f32 %v2470, %v2480
    %v2483 = vadd.f32 %v2471, %v2480
    %v2484 = vadd.f32 %v2472, %v2480
    %v2485 = vadd.f32 %v2473, %v2480
    %v2486 = vtanh.pop %v2482
    %v2487 = vtanh.pop %v2483
    %v2488 = vtanh.pop %v2484
    %v2489 = vtanh.pop %v2485
    %2490 = vrot.lane.b32.xlu0 %v1028, 32
    %v2491 = vpop.permute.xlu0 %2490
    %2492 = vrot.lane.b32.xlu0 %v1029, 32
    %v2493 = vpop.permute.xlu0 %2492
    %2494 = vrot.lane.b32.xlu0 %v1030, 32
    %v2495 = vpop.permute.xlu0 %2494
    %2496 = vrot.lane.b32.xlu0 %v1031, 32
    %v2497 = vpop.permute.xlu0 %2496
    %v2502 = vmul.f32 %v1846, %v2491
    %v2503 = vmul.f32 %v1848, %v2493
    %v2504 = vmul.f32 %v1850, %v2495
    %v2505 = vmul.f32 %v1852, %v2497
    %v2506 = vsub.f32 1.0, %v1846
    %v2507 = vsub.f32 1.0, %v1848
    %v2508 = vsub.f32 1.0, %v1850
    %v2509 = vsub.f32 1.0, %v1852
    %2514 = vrot.lane.b32.xlu0 %v2486, 96
    %v2515 = vpop.permute.xlu0 %2514
    %2516 = vrot.lane.b32.xlu0 %v2487, 96
    %v2517 = vpop.permute.xlu0 %2516
    %2518 = vrot.lane.b32.xlu0 %v2488, 96
    %v2519 = vpop.permute.xlu0 %2518
    %2520 = vrot.lane.b32.xlu0 %v2489, 96
    %v2521 = vpop.permute.xlu0 %2520
    %v2526 = vmul.f32 %v2506, %v2515
    %v2527 = vmul.f32 %v2507, %v2517
    %v2528 = vmul.f32 %v2508, %v2519
    %v2529 = vmul.f32 %v2509, %v2521
    %v2530 = vadd.f32 %v2502, %v2526
    %v2531 = vadd.f32 %v2503, %v2527
    %v2532 = vadd.f32 %v2504, %v2528
    %v2533 = vadd.f32 %v2505, %v2529
    %2538 = vrot.lane.b32.xlu0 %v2530, 96
    %v2539 = vpop.permute.xlu0 %2538
    %2540 = vrot.lane.b32.xlu0 %v2531, 96
    %v2541 = vpop.permute.xlu0 %2540
    %2542 = vrot.lane.b32.xlu0 %v2532, 96
    %v2543 = vpop.permute.xlu0 %2542
    %2544 = vrot.lane.b32.xlu0 %v2533, 96
    %v2545 = vpop.permute.xlu0 %2544
    %2550 = vst.msk [vmem:[#allocation4] sm:$0xff] %vm1320, %v2539
    %2551 = vst.msk [vmem:[#allocation4 + $0x8] sm:$0xff] %vm1320, %v2541
    %2552 = vst.msk [vmem:[#allocation4 + $0x10] sm:$0xff] %vm1320, %v2543
    %2553 = vst.msk [vmem:[#allocation4 + $0x18] sm:$0xff] %vm1320, %v2545
    %2554 = vst.msk [vmem:[#allocation3] sm:$0xff] %vm1320, %v2539
    %2555 = vst.msk [vmem:[#allocation3 + $0x8] sm:$0xff] %vm1320, %v2541
    %2556 = vst.msk [vmem:[#allocation3 + $0x10] sm:$0xff] %vm1320, %v2543
    %2557 = vst.msk [vmem:[#allocation3 + $0x18] sm:$0xff] %vm1320, %v2545
    // Predicated region
    $region30: #{agcrn_cell_seq.1} parent=1 // pred_check
      _
    $region31: #{agcrn_cell_seq.1} parent=1 // pred_check_branch
      %2559 = sbr.rel (0) target = $region33
    $region32: #{agcrn_cell_seq.1} parent=1 // pred_region
      %s2561 = ssub.s32 512, 512
      %2562 = vsyncadd [#allocation5], %s2561
      %s2563 = sshll.u32 [#allocation4], 4
      %s2564 = int_to_ptr.vmem [resolvable:$true] %s2563
      %2569 = dma.vmem_to_hbm [thread:$0]  %s2564, 512, %s6, [#allocation5], 128, 128, 8
    $region33: #{agcrn_cell_seq.1} parent=1 // pred_fallthru
      _
    // Predicated region
    $region34: #{agcrn_cell_seq.1} parent=1 // pred_check
      _
    $region35: #{agcrn_cell_seq.1} parent=1 // pred_check_branch
      %2571 = sbr.rel (0) target = $region37
    $region36: #{agcrn_cell_seq.1} parent=1 // pred_region
      %2572 = dma.done [#allocation5], 512
    $region37: #{agcrn_cell_seq.1} parent=1 // pred_fallthru
      _
    %2573 = vsyncpa [#allocation5], 1

</llo_original>
